<compile_context>
chip_gen: v6e
topology: v6e:2x2x1
jax: 0.10.0
libtpu: 0.0.40
codegen_flags: <defaults>
</compile_context>

<pallas_src>
import functools

import jax
import jax.numpy as jnp
from jax.experimental import pallas as pl
from jax.experimental.pallas import tpu as pltpu


def _round_up(x, m):
    return (x + m - 1) // m * m


def _pick_tile(n_pad, cap):
    """Largest 128*2^k that divides n_pad and is <= cap."""
    t = 128
    while 2 * t <= cap and n_pad % (2 * t) == 0:
        t *= 2
    return t


# ------------------ kernel 1: projection + attention score matvecs ----------

def _proj_kernel(x_ref, wt_ref, a_ref, z_ref, s_ref):
    # z = x @ W^T (f32 accumulate; scores feed exp(), keep them accurate).
    z = jnp.dot(x_ref[...], wt_ref[...], preferred_element_type=jnp.float32)
    z_ref[...] = z.astype(z_ref.dtype)              # bf16 copy for the N^2 matmul
    # s[:, 0] = z . a_d (source half), s[:, 1] = z . a_r (dest half)
    s_ref[...] = jnp.dot(z, a_ref[...], preferred_element_type=jnp.float32)


# ------------------ kernel 2: online-softmax attention ----------------------

def _attn_kernel(sr_ref, sd_ref, cnt_ref, z_ref, out_ref, m_sc, l_sc, acc_sc,
                 *, tj, z_resident):
    j = pl.program_id(1)

    @pl.when(j == 0)
    def _():
        m_sc[...] = jnp.full_like(m_sc, -1e30)
        l_sc[...] = jnp.zeros_like(l_sc)
        acc_sc[...] = jnp.zeros_like(acc_sc)

    cnt = cnt_ref[...].astype(jnp.float32)          # int8 -> f32 once; reused twice
    # e[i, j] = s_r[i] + s_d[j] ; leaky_relu slope 0.01 (single VALU max)
    e = sr_ref[...] + sd_ref[...]                   # (TI,1)+(1,TJ) -> (TI,TJ)
    e = jnp.maximum(e, 0.01 * e)
    # Mask absent edges BEFORE the max (keeps the softmax well-defined).
    e = jnp.where(cnt > 0.0, e, jnp.float32(-1e30))

    m_prev = m_sc[...]
    m_new = jnp.maximum(m_prev, jnp.max(e, axis=-1, keepdims=True))
    corr = jnp.exp(m_prev - m_new)
    p = cnt * jnp.exp(e - m_new)                    # count-weighted, f32
    l_sc[...] = corr * l_sc[...] + jnp.sum(p, axis=-1, keepdims=True)

    if z_resident:
        # Whole z lives in VMEM (constant block index); slice the j-tile.
        z_blk = z_ref[pl.ds(pl.multiple_of(j * tj, tj), tj), :]
    else:
        z_blk = z_ref[...]
    acc_sc[...] = corr * acc_sc[...] + jnp.dot(
        p.astype(jnp.bfloat16), z_blk, preferred_element_type=jnp.float32)
    m_sc[...] = m_new

    @pl.when(j == pl.num_programs(1) - 1)
    def _():
        inv = pl.reciprocal(l_sc[...], approx=True)  # EUP slot, ~free
        out_ref[...] = jnp.maximum(acc_sc[...] * inv, 0.0).astype(out_ref.dtype)


# ------------------------------- wrapper -------------------------------------

def gat_layer_pallas(node_features, edge_domain, edge_range, W, a, *,
                     ti=None, tj=None):
    """Forward pass of GATLayer (dropout p=0 -> identity)."""
    N, F = node_features.shape
    O = W.shape[0]

    n_pad = _round_up(N, 128)                        # decoupled from tile sizes
    o_pad = _round_up(O, 128)                        # lane-dense output stores

    if ti is None:
        ti = _pick_tile(n_pad, 512)
    if tj is None:
        tj = _pick_tile(n_pad, 2048)
    # Give the "parallel" i axis >= 2 steps when possible so both v7x
    # TensorCores get work.
    while n_pad // ti < 2 and ti > 128:
        ti //= 2
    assert n_pad % ti == 0 and n_pad % tj == 0

    x = jnp.pad(node_features.astype(jnp.float32), ((0, n_pad - N), (0, 0)))
    wt = jnp.pad(W.T.astype(jnp.float32), ((0, 0), (0, o_pad - O)))
    # a_cat[:, 0] = a_d (source half), a_cat[:, 1] = a_r (dest half)
    a_cat = jnp.pad(
        jnp.stack([a[0, :O], a[0, O:]], axis=1).astype(jnp.float32),
        ((0, o_pad - O), (0, 0)))

    # counts[i, j] = multiplicity of edge (j -> i), + 1 self-loop for every
    # (including padded) node so every softmax row is non-empty.  Built
    # directly in int8 (1 B/elem) with the self-loops folded into the scatter
    # indices -> single O(N^2) materialization, no f32 intermediates.
    # int8 is exact for edge multiplicities <= 127.
    # TODO(synk): for very sparse graphs, replace this dense O(N^2) stream with
    # CSR offsets via PrefetchScalarGridSpec scalar prefetch.
    self_idx = jnp.arange(n_pad, dtype=jnp.int32)
    er_all = jnp.concatenate([edge_range.astype(jnp.int32), self_idx])
    ed_all = jnp.concatenate([edge_domain.astype(jnp.int32), self_idx])
    counts = jnp.zeros((n_pad, n_pad), jnp.int8).at[er_all, ed_all].add(
        jnp.int8(1))

    gi, gj = n_pad // ti, n_pad // tj

    # -------- kernel 1: z (bf16) + the two attention matvecs ----------------
    z, s = pl.pallas_call(
        _proj_kernel,
        out_shape=(jax.ShapeDtypeStruct((n_pad, o_pad), jnp.bfloat16),
                   jax.ShapeDtypeStruct((n_pad, 2), jnp.float32)),
        grid_spec=pltpu.PrefetchScalarGridSpec(
            num_scalar_prefetch=0,
            grid=(gi,),
            in_specs=[pl.BlockSpec((ti, F), lambda i: (i, 0)),
                      pl.BlockSpec((F, o_pad), lambda i: (0, 0)),
                      pl.BlockSpec((o_pad, 2), lambda i: (0, 0))],
            out_specs=(pl.BlockSpec((ti, o_pad), lambda i: (i, 0)),
                       pl.BlockSpec((ti, 2), lambda i: (i, 0)))),
        compiler_params=pltpu.CompilerParams(
            dimension_semantics=("parallel",),
            vmem_limit_bytes=32 * 1024 * 1024),
    )(x, wt, a_cat)

    sd_row = s[:, 0].reshape(1, n_pad)      # source-half scores, lane-dense row
    sr_col = s[:, 1].reshape(n_pad, 1)      # dest-half scores, column

    # -------- kernel 2: flash-style masked softmax + alpha @ z --------------
    # Keep z fully VMEM-resident when it fits (removes the per-i-tile
    # re-stream, which was ~o_pad/ti of the counts traffic); otherwise stream
    # a (tj, o_pad) tile per step.
    z_resident = 2 * (2 * n_pad * o_pad) <= 8 * 1024 * 1024  # bf16, dbl-buffered
    if z_resident:
        z_spec = pl.BlockSpec((n_pad, o_pad), lambda i, j: (0, 0))
        z_bytes = 2 * n_pad * o_pad
    else:
        z_spec = pl.BlockSpec((tj, o_pad), lambda i, j: (j, 0))
        z_bytes = 2 * gi * n_pad * o_pad

    cost = pl.CostEstimate(
        flops=int(2 * n_pad * n_pad * o_pad + 10 * n_pad * n_pad),
        transcendentals=int(n_pad * n_pad),
        bytes_accessed=int(n_pad * n_pad              # counts (int8)
                           + z_bytes                  # z (bf16)
                           + 4 * n_pad * o_pad        # out (f32)
                           + 12 * n_pad))             # scores

    kernel = functools.partial(_attn_kernel, tj=tj, z_resident=z_resident)
    out = pl.pallas_call(
        kernel,
        out_shape=jax.ShapeDtypeStruct((n_pad, o_pad), jnp.float32),
        grid_spec=pltpu.PrefetchScalarGridSpec(
            num_scalar_prefetch=0,
            grid=(gi, gj),
            in_specs=[pl.BlockSpec((ti, 1), lambda i, j: (i, 0)),
                      pl.BlockSpec((1, tj), lambda i, j: (0, j)),
                      pl.BlockSpec((ti, tj), lambda i, j: (i, j)),
                      z_spec],
            out_specs=pl.BlockSpec((ti, o_pad), lambda i, j: (i, 0)),
            scratch_shapes=[pltpu.VMEM((ti, 1), jnp.float32),
                            pltpu.VMEM((ti, 1), jnp.float32),
                            pltpu.VMEM((ti, o_pad), jnp.float32)]),
        compiler_params=pltpu.CompilerParams(
            dimension_semantics=("parallel", "arbitrary"),
            vmem_limit_bytes=48 * 1024 * 1024),
        cost_estimate=cost,
    )(sr_col, sd_row, counts, z)

    return out[:N, :O]


# ----------------------------- pure-JAX reference ----------------------------

def gat_layer_ref(node_features, edge_domain, edge_range, W, a):
    """Edge-list reference mirroring the PyTorch code (sort order irrelevant)."""
    N = node_features.shape[0]
    O = W.shape[0]
    z = node_features @ W.T
    self_idx = jnp.arange(N, dtype=edge_domain.dtype)
    ed2 = jnp.concatenate([edge_domain, self_idx], 0)
    er2 = jnp.concatenate([edge_range, self_idx], 0)
    dz = z[ed2]
    rz = z[er2]
    e = jnp.concatenate([dz, rz], 1) @ a.T                  # (E2, 1)
    e = jnp.where(e >= 0.0, e, 0.01 * e)[:, 0]
    m = jax.ops.segment_max(e, er2, num_segments=N)
    p = jnp.exp(e - m[er2])
    denom = jax.ops.segment_sum(p, er2, num_segments=N)
    alpha = p / denom[er2]
    out = jax.ops.segment_sum(alpha[:, None] * dz, er2, num_segments=N)
    return jnp.maximum(out, 0.0)


# ----------------------------------- main ------------------------------------

if __name__ == "__main__":
    N_NODES, N_FEATURES, N_OUTPUT, N_EDGES = 16, 16, 32, 24

    key = jax.random.PRNGKey(0)
    kx, ke1, ke2, kw, ka = jax.random.split(key, 5)

    node_features = jax.random.normal(kx, (N_NODES, N_FEATURES), jnp.float32)
    edge_domain = jax.random.randint(ke1, (N_EDGES,), 0, N_NODES, jnp.int32)
    edge_range = jax.random.randint(ke2, (N_EDGES,), 0, N_NODES, jnp.int32)

    # xavier_uniform_ with gain = calculate_gain('relu') = sqrt(2)
    gain = jnp.sqrt(2.0)
    bound_w = gain * jnp.sqrt(6.0 / (N_FEATURES + N_OUTPUT))
    W = jax.random.uniform(kw, (N_OUTPUT, N_FEATURES), jnp.float32, -bound_w, bound_w)
    bound_a = gain * jnp.sqrt(6.0 / (2 * N_OUTPUT + 1))
    a = jax.random.uniform(ka, (1, 2 * N_OUTPUT), jnp.float32, -bound_a, bound_a)

    gat_fn = jax.jit(gat_layer_pallas)
    out = jax.block_until_ready(gat_fn(node_features, edge_domain, edge_range, W, a))

    ref = jax.block_until_ready(
        gat_layer_ref(node_features, edge_domain, edge_range, W, a))
    assert out.shape == (N_NODES, N_OUTPUT)
    # bf16 operands on the alpha@z MXU matmul (f32 accumulate) + approx
    # reciprocal -> ~0.4% relative error contract.
    assert jnp.allclose(out, ref, atol=1e-2, rtol=1e-2), (
        f"max abs err {jnp.max(jnp.abs(out - ref))}")

    print("KERNEL_OK")
</pallas_src>

<mosaic_0001>
module attributes {stable_mosaic.version = 11 : i64} {
  func.func @_proj_kernel(%arg0: i32, %arg1: memref<128x16xf32, #tpu.memory_space<vmem>>, %arg2: memref<16x128xf32, #tpu.memory_space<vmem>>, %arg3: memref<128x2xf32, #tpu.memory_space<vmem>>, %arg4: memref<128x128xbf16, #tpu.memory_space<vmem>>, %arg5: memref<128x2xf32, #tpu.memory_space<vmem>>) attributes {dimension_semantics = [#tpu.dimension_semantics<parallel>], iteration_bounds = array<i64: 1>, scalar_prefetch = 0 : i64, scratch_operands = 0 : i64, tpu.core_type = #tpu.core_type<tc>, window_params = [{transform_indices = @transform_0, window_bounds = array<i64: 128, 16>}, {pipeline_mode = #tpu.pipeline_mode<synchronous>, transform_indices = @transform_1, window_bounds = array<i64: 16, 128>}, {pipeline_mode = #tpu.pipeline_mode<synchronous>, transform_indices = @transform_2, window_bounds = array<i64: 128, 2>}, {transform_indices = @transform_3, window_bounds = array<i64: 128, 128>}, {transform_indices = @transform_4, window_bounds = array<i64: 128, 2>}]} {
    %c0 = arith.constant 0 : index
    %c0_0 = arith.constant 0 : index
    %0 = vector.load %arg1[%c0, %c0_0] : memref<128x16xf32, #tpu.memory_space<vmem>>, vector<128x16xf32>
    %c0_1 = arith.constant 0 : index
    %c0_2 = arith.constant 0 : index
    %1 = vector.load %arg2[%c0_1, %c0_2] : memref<16x128xf32, #tpu.memory_space<vmem>>, vector<16x128xf32>
    %cst = arith.constant dense<0.000000e+00> : vector<128x128xf32>
    %2 = tpu.matmul %0, %1, %cst {dimension_numbers = #tpu.dot_dimension_numbers<[1], [0], [0], [1], [0, 0, 1, 1], [], []>} : vector<128x16xf32>, vector<16x128xf32>, vector<128x128xf32> -> vector<128x128xf32>
    %3 = arith.truncf %2 : vector<128x128xf32> to vector<128x128xbf16>
    %c0_3 = arith.constant 0 : index
    %c0_4 = arith.constant 0 : index
    %4 = vector.load %arg4[%c0_3, %c0_4] : memref<128x128xbf16, #tpu.memory_space<vmem>>, vector<128x128xbf16>
    tpu.vector_store %arg4[%c0_3, %c0_4], %3 {strides = array<i32>} : memref<128x128xbf16, #tpu.memory_space<vmem>>, vector<128x128xbf16>,
    %c0_5 = arith.constant 0 : index
    %c0_6 = arith.constant 0 : index
    %5 = vector.load %arg3[%c0_5, %c0_6] : memref<128x2xf32, #tpu.memory_space<vmem>>, vector<128x2xf32>
    %cst_7 = arith.constant dense<0.000000e+00> : vector<128x2xf32>
    %6 = tpu.matmul %2, %5, %cst_7 {dimension_numbers = #tpu.dot_dimension_numbers<[1], [0], [0], [1], [0, 0, 1, 1], [], []>} : vector<128x128xf32>, vector<128x2xf32>, vector<128x2xf32> -> vector<128x2xf32>
    %c0_8 = arith.constant 0 : index
    %c0_9 = arith.constant 0 : index
    %7 = vector.load %arg5[%c0_8, %c0_9] : memref<128x2xf32, #tpu.memory_space<vmem>>, vector<128x2xf32>
    tpu.vector_store %arg5[%c0_8, %c0_9], %6 {strides = array<i32>} : memref<128x2xf32, #tpu.memory_space<vmem>>, vector<128x2xf32>,
    return
  }
  func.func @transform_0(%arg0: i32) -> (i32, i32) {
    %c0_i32 = arith.constant 0 : i32
    %c0_i32_0 = arith.constant 0 : i32
    return %arg0, %c0_i32 : i32, i32
  }
  func.func @transform_1(%arg0: i32) -> (i32, i32) {
    %c0_i32 = arith.constant 0 : i32
    %c0_i32_0 = arith.constant 0 : i32
    %c0_i32_1 = arith.constant 0 : i32
    return %c0_i32, %c0_i32_0 : i32, i32
  }
  func.func @transform_2(%arg0: i32) -> (i32, i32) {
    %c0_i32 = arith.constant 0 : i32
    %c0_i32_0 = arith.constant 0 : i32
    %c0_i32_1 = arith.constant 0 : i32
    return %c0_i32, %c0_i32_0 : i32, i32
  }
  func.func @transform_3(%arg0: i32) -> (i32, i32) {
    %c0_i32 = arith.constant 0 : i32
    %c0_i32_0 = arith.constant 0 : i32
    return %arg0, %c0_i32 : i32, i32
  }
  func.func @transform_4(%arg0: i32) -> (i32, i32) {
    %c0_i32 = arith.constant 0 : i32
    %c0_i32_0 = arith.constant 0 : i32
    return %arg0, %c0_i32 : i32, i32
  }
}

module attributes {stable_mosaic.version = 11 : i64} {
  func.func @_attn_kernel(%arg0: i32, %arg1: i32, %arg2: memref<128x1xf32, #tpu.memory_space<vmem>>, %arg3: memref<1x128xf32, #tpu.memory_space<vmem>>, %arg4: memref<128x128xi8, #tpu.memory_space<vmem>>, %arg5: memref<128x128xbf16, #tpu.memory_space<vmem>>, %arg6: memref<128x128xf32, #tpu.memory_space<vmem>>, %arg7: memref<128x1xf32, #tpu.memory_space<vmem>>, %arg8: memref<128x1xf32, #tpu.memory_space<vmem>>, %arg9: memref<128x128xf32, #tpu.memory_space<vmem>>) attributes {dimension_semantics = [#tpu.dimension_semantics<parallel>, #tpu.dimension_semantics<arbitrary>], iteration_bounds = array<i64: 1, 1>, scalar_prefetch = 0 : i64, scratch_operands = 3 : i64, tpu.core_type = #tpu.core_type<tc>, window_params = [{transform_indices = @transform_0, window_bounds = array<i64: 128, 1>}, {transform_indices = @transform_1, window_bounds = array<i64: 1, 128>}, {transform_indices = @transform_2, window_bounds = array<i64: 128, 128>}, {pipeline_mode = #tpu.pipeline_mode<synchronous>, transform_indices = @transform_3, window_bounds = array<i64: 128, 128>}, {transform_indices = @transform_4, window_bounds = array<i64: 128, 128>}]} {
    %c0_i32 = arith.constant 0 : i32
    %0 = arith.cmpi eq, %arg1, %c0_i32 : i32
    %1 = arith.extui %0 : i1 to i32
    %c0_i32_0 = arith.constant 0 : i32
    %2 = arith.cmpi ne, %1, %c0_i32_0 : i32
    scf.if %2 {
      %cst_26 = arith.constant -1.000000e+30 : f32
      %48 = vector.broadcast %cst_26 : f32 to vector<128x1xf32>
      %c0_27 = arith.constant 0 : index
      %c0_28 = arith.constant 0 : index
      %49 = vector.load %arg7[%c0_27, %c0_28] : memref<128x1xf32, #tpu.memory_space<vmem>>, vector<128x1xf32>
      tpu.vector_store %arg7[%c0_27, %c0_28], %48 {strides = array<i32>} : memref<128x1xf32, #tpu.memory_space<vmem>>, vector<128x1xf32>,
      %cst_29 = arith.constant 0.000000e+00 : f32
      %50 = vector.broadcast %cst_29 : f32 to vector<128x1xf32>
      %c0_30 = arith.constant 0 : index
      %c0_31 = arith.constant 0 : index
      %51 = vector.load %arg8[%c0_30, %c0_31] : memref<128x1xf32, #tpu.memory_space<vmem>>, vector<128x1xf32>
      tpu.vector_store %arg8[%c0_30, %c0_31], %50 {strides = array<i32>} : memref<128x1xf32, #tpu.memory_space<vmem>>, vector<128x1xf32>,
      %cst_32 = arith.constant 0.000000e+00 : f32
      %52 = vector.broadcast %cst_32 : f32 to vector<128x128xf32>
      %c0_33 = arith.constant 0 : index
      %c0_34 = arith.constant 0 : index
      %53 = vector.load %arg9[%c0_33, %c0_34] : memref<128x128xf32, #tpu.memory_space<vmem>>, vector<128x128xf32>
      tpu.vector_store %arg9[%c0_33, %c0_34], %52 {strides = array<i32>} : memref<128x128xf32, #tpu.memory_space<vmem>>, vector<128x128xf32>,
    } else {
    }
    %c0 = arith.constant 0 : index
    %c0_1 = arith.constant 0 : index
    %3 = vector.load %arg4[%c0, %c0_1] : memref<128x128xi8, #tpu.memory_space<vmem>>, vector<128x128xi8>
    %4 = arith.sitofp %3 : vector<128x128xi8> to vector<128x128xf32>
    %c0_2 = arith.constant 0 : index
    %c0_3 = arith.constant 0 : index
    %5 = vector.load %arg2[%c0_2, %c0_3] : memref<128x1xf32, #tpu.memory_space<vmem>>, vector<128x1xf32>
    %c0_4 = arith.constant 0 : index
    %c0_5 = arith.constant 0 : index
    %6 = vector.load %arg3[%c0_4, %c0_5] : memref<1x128xf32, #tpu.memory_space<vmem>>, vector<1x128xf32>
    %7 = vector.broadcast %5 : vector<128x1xf32> to vector<128x128xf32>
    %8 = vector.broadcast %6 : vector<1x128xf32> to vector<128x128xf32>
    %9 = arith.addf %7, %8 : vector<128x128xf32>
    %cst = arith.constant 0.00999999977 : f32
    %10 = vector.broadcast %cst : f32 to vector<128x128xf32>
    %11 = arith.mulf %10, %9 : vector<128x128xf32>
    %12 = arith.maximumf %9, %11 : vector<128x128xf32>
    %cst_6 = arith.constant 0.000000e+00 : f32
    %13 = vector.broadcast %cst_6 : f32 to vector<128x128xf32>
    %14 = arith.cmpf ogt, %4, %13 : vector<128x128xf32>
    %cst_7 = arith.constant -1.000000e+30 : f32
    %15 = vector.broadcast %cst_7 : f32 to vector<128x128xf32>
    %16 = arith.select %14, %12, %15 : vector<128x128xi1>, vector<128x128xf32>
    %c0_8 = arith.constant 0 : index
    %c0_9 = arith.constant 0 : index
    %17 = vector.load %arg7[%c0_8, %c0_9] : memref<128x1xf32, #tpu.memory_space<vmem>>, vector<128x1xf32>
    %cst_10 = arith.constant dense<0xFF800000> : vector<128xf32>
    %18 = vector.multi_reduction <maximumf>, %16, %cst_10 [1] : vector<128x128xf32> to vector<128xf32>
    %19 = vector.shape_cast %18 : vector<128xf32> to vector<128x1xf32>
    %20 = arith.maximumf %17, %19 : vector<128x1xf32>
    %21 = arith.subf %17, %20 : vector<128x1xf32>
    %22 = math.exp %21 : vector<128x1xf32>
    %23 = vector.broadcast %20 : vector<128x1xf32> to vector<128x128xf32>
    %24 = arith.subf %16, %23 : vector<128x128xf32>
    %25 = math.exp %24 : vector<128x128xf32>
    %26 = arith.mulf %4, %25 : vector<128x128xf32>
    %c0_11 = arith.constant 0 : index
    %c0_12 = arith.constant 0 : index
    %27 = vector.load %arg8[%c0_11, %c0_12] : memref<128x1xf32, #tpu.memory_space<vmem>>, vector<128x1xf32>
    %28 = arith.mulf %22, %27 : vector<128x1xf32>
    %cst_13 = arith.constant dense<0.000000e+00> : vector<128xf32>
    %29 = vector.multi_reduction <add>, %26, %cst_13 [1] : vector<128x128xf32> to vector<128xf32>
    %30 = vector.shape_cast %29 : vector<128xf32> to vector<128x1xf32>
    %31 = arith.addf %28, %30 : vector<128x1xf32>
    %c0_14 = arith.constant 0 : index
    %c0_15 = arith.constant 0 : index
    %32 = vector.load %arg8[%c0_14, %c0_15] : memref<128x1xf32, #tpu.memory_space<vmem>>, vector<128x1xf32>
    tpu.vector_store %arg8[%c0_14, %c0_15], %31 {strides = array<i32>} : memref<128x1xf32, #tpu.memory_space<vmem>>, vector<128x1xf32>,
    %c128_i32 = arith.constant 128 : i32
    %33 = arith.muli %arg1, %c128_i32 : i32
    %34 = tpu.assume_multiple %33, 128 : i32
    %35 = arith.index_cast %34 : i32 to index
    %c0_16 = arith.constant 0 : index
    %36 = vector.load %arg5[%35, %c0_16] : memref<128x128xbf16, #tpu.memory_space<vmem>>, vector<128x128xbf16>
    %c0_17 = arith.constant 0 : index
    %c0_18 = arith.constant 0 : index
    %37 = vector.load %arg9[%c0_17, %c0_18] : memref<128x128xf32, #tpu.memory_space<vmem>>, vector<128x128xf32>
    %38 = vector.broadcast %22 : vector<128x1xf32> to vector<128x128xf32>
    %39 = arith.mulf %38, %37 : vector<128x128xf32>
    %40 = arith.truncf %26 : vector<128x128xf32> to vector<128x128xbf16>
    %cst_19 = arith.constant dense<0.000000e+00> : vector<128x128xf32>
    %41 = tpu.matmul %40, %36, %cst_19 {dimension_numbers = #tpu.dot_dimension_numbers<[1], [0], [0], [1], [0, 0, 1, 1], [], []>} : vector<128x128xbf16>, vector<128x128xbf16>, vector<128x128xf32> -> vector<128x128xf32>
    %42 = arith.addf %39, %41 : vector<128x128xf32>
    %c0_20 = arith.constant 0 : index
    %c0_21 = arith.constant 0 : index
    %43 = vector.load %arg9[%c0_20, %c0_21] : memref<128x128xf32, #tpu.memory_space<vmem>>, vector<128x128xf32>
    tpu.vector_store %arg9[%c0_20, %c0_21], %42 {strides = array<i32>} : memref<128x128xf32, #tpu.memory_space<vmem>>, vector<128x128xf32>,
    %c0_22 = arith.constant 0 : index
    %c0_23 = arith.constant 0 : index
    %44 = vector.load %arg7[%c0_22, %c0_23] : memref<128x1xf32, #tpu.memory_space<vmem>>, vector<128x1xf32>
    tpu.vector_store %arg7[%c0_22, %c0_23], %20 {strides = array<i32>} : memref<128x1xf32, #tpu.memory_space<vmem>>, vector<128x1xf32>,
    %c0_i32_24 = arith.constant 0 : i32
    %45 = arith.cmpi eq, %arg1, %c0_i32_24 : i32
    %46 = arith.extui %45 : i1 to i32
    %c0_i32_25 = arith.constant 0 : i32
    %47 = arith.cmpi ne, %46, %c0_i32_25 : i32
    scf.if %47 {
      %c0_26 = arith.constant 0 : index
      %c0_27 = arith.constant 0 : index
      %48 = vector.load %arg8[%c0_26, %c0_27] : memref<128x1xf32, #tpu.memory_space<vmem>>, vector<128x1xf32>
      %49 = tpu.reciprocal %48 {approx = true} : vector<128x1xf32> -> vector<128x1xf32>
      %c0_28 = arith.constant 0 : index
      %c0_29 = arith.constant 0 : index
      %50 = vector.load %arg9[%c0_28, %c0_29] : memref<128x128xf32, #tpu.memory_space<vmem>>, vector<128x128xf32>
      %51 = vector.broadcast %49 : vector<128x1xf32> to vector<128x128xf32>
      %52 = arith.mulf %50, %51 : vector<128x128xf32>
      %cst_30 = arith.constant 0.000000e+00 : f32
      %53 = vector.broadcast %cst_30 : f32 to vector<128x128xf32>
      %54 = arith.maximumf %52, %53 : vector<128x128xf32>
      %c0_31 = arith.constant 0 : index
      %c0_32 = arith.constant 0 : index
      %55 = vector.load %arg6[%c0_31, %c0_32] : memref<128x128xf32, #tpu.memory_space<vmem>>, vector<128x128xf32>
      tpu.vector_store %arg6[%c0_31, %c0_32], %54 {strides = array<i32>} : memref<128x128xf32, #tpu.memory_space<vmem>>, vector<128x128xf32>,
    } else {
    }
    return
  }
  func.func @transform_0(%arg0: i32, %arg1: i32) -> (i32, i32) {
    %c0_i32 = arith.constant 0 : i32
    %c0_i32_0 = arith.constant 0 : i32
    return %arg0, %c0_i32 : i32, i32
  }
  func.func @transform_1(%arg0: i32, %arg1: i32) -> (i32, i32) {
    %c0_i32 = arith.constant 0 : i32
    %c0_i32_0 = arith.constant 0 : i32
    return %c0_i32, %arg1 : i32, i32
  }
  func.func @transform_2(%arg0: i32, %arg1: i32) -> (i32, i32) {
    %c0_i32 = arith.constant 0 : i32
    return %arg0, %arg1 : i32, i32
  }
  func.func @transform_3(%arg0: i32, %arg1: i32) -> (i32, i32) {
    %c0_i32 = arith.constant 0 : i32
    %c0_i32_0 = arith.constant 0 : i32
    %c0_i32_1 = arith.constant 0 : i32
    return %c0_i32, %c0_i32_0 : i32, i32
  }
  func.func @transform_4(%arg0: i32, %arg1: i32) -> (i32, i32) {
    %c0_i32 = arith.constant 0 : i32
    %c0_i32_0 = arith.constant 0 : i32
    return %arg0, %c0_i32 : i32, i32
  }
}

</mosaic_0001>

<llo_original>
// kernel: gat_layer_pallas.2
$region0: #{gat_layer_pallas.2}
  #allocation0 [shape = 'u32[]', space=smem, size = 0x4, offset = 0x4, fixed_abs, tag = 'smem constant byte address 0x4 - core index']
  #allocation1 [shape = 'u32[144,128]{1,0:T(1,128)}', space=vmem, size = 0x12000, scoped, tag = 'internal scratch']
  %s0 = inlined_call_operand.vmem [shape: f32[128,16], index: 0, kind: input, shape index: {}]
  %s1 = inlined_call_operand.vmem [shape: f32[16,128], index: 1, kind: input, shape index: {}]
  %s2 = inlined_call_operand.vmem [shape: f32[128,2], index: 2, kind: input, shape index: {}]
  %s3 = inlined_call_operand.vmem [shape: bf16[128,128], index: 3, kind: output, shape index: {0}]
  %s4 = inlined_call_operand.vmem [shape: f32[128,2], index: 4, kind: output, shape index: {1}]
  %5 = xla_tuple %s3, %s4
  %s6 = sld [smem:[#allocation0]]
  $region30: #{gat_layer_pallas.2} parent=0
    _
  %s8 = ssub.s32 1, %s6
  %s9 = scalar_select 0, %s8, %s6
  // Predicated region
  $region2: #{gat_layer_pallas.2} parent=0 // pred_check
    _
  $region3: #{gat_layer_pallas.2} parent=0 // pred_check_branch
    %11 = sbr.rel (0) target = $region5
  $region4: #{gat_layer_pallas.2} parent=0 // pred_region
    _
  $region5: #{gat_layer_pallas.2} parent=0 // pred_fallthru
    _
  // Predicated region
  $region6: #{gat_layer_pallas.2} parent=0 // pred_check
    _
  $region7: #{gat_layer_pallas.2} parent=0 // pred_check_branch
    %13 = sbr.rel (0) target = $region9
  $region8: #{gat_layer_pallas.2} parent=0 // pred_region
    _
  $region9: #{gat_layer_pallas.2} parent=0 // pred_fallthru
    _
  // Predicated region
  $region10: #{gat_layer_pallas.2} parent=0 // pred_check
    _
  $region11: #{gat_layer_pallas.2} parent=0 // pred_check_branch
    %15 = sbr.rel (0) target = $region13
  $region12: #{gat_layer_pallas.2} parent=0 // pred_region
    _
  $region13: #{gat_layer_pallas.2} parent=0 // pred_fallthru
    _
  %v16 = vld [vmem:[%s0] sm:$0xff]
  %v17 = vld [vmem:[%s0 + $0x8] sm:$0xff]
  %v18 = vld [vmem:[%s0 + $0x10] sm:$0xff]
  %v19 = vld [vmem:[%s0 + $0x18] sm:$0xff]
  %v20 = vld [vmem:[%s0 + $0x20] sm:$0xff]
  %v21 = vld [vmem:[%s0 + $0x28] sm:$0xff]
  %v22 = vld [vmem:[%s0 + $0x30] sm:$0xff]
  %v23 = vld [vmem:[%s0 + $0x38] sm:$0xff]
  %v24 = vld [vmem:[%s0 + $0x40] sm:$0xff]
  %v25 = vld [vmem:[%s0 + $0x48] sm:$0xff]
  %v26 = vld [vmem:[%s0 + $0x50] sm:$0xff]
  %v27 = vld [vmem:[%s0 + $0x58] sm:$0xff]
  %v28 = vld [vmem:[%s0 + $0x60] sm:$0xff]
  %v29 = vld [vmem:[%s0 + $0x68] sm:$0xff]
  %v30 = vld [vmem:[%s0 + $0x70] sm:$0xff]
  %v31 = vld [vmem:[%s0 + $0x78] sm:$0xff]
  %v32 = vld [vmem:[%s1] sm:$0xff]
  %v33 = vld [vmem:[%s1 + $0x8] sm:$0xff]
  %vm34 = vcmask 130048
  %v36 = vsel %vm34, %v16, 0
  %v39 = vsel %vm34, %v17, 0
  %v42 = vsel %vm34, %v18, 0
  %v45 = vsel %vm34, %v19, 0
  %v48 = vsel %vm34, %v20, 0
  %v51 = vsel %vm34, %v21, 0
  %v54 = vsel %vm34, %v22, 0
  %v57 = vsel %vm34, %v23, 0
  %v60 = vsel %vm34, %v24, 0
  %v63 = vsel %vm34, %v25, 0
  %v66 = vsel %vm34, %v26, 0
  %v69 = vsel %vm34, %v27, 0
  %v72 = vsel %vm34, %v28, 0
  %v75 = vsel %vm34, %v29, 0
  %v78 = vsel %vm34, %v30, 0
  %v81 = vsel %vm34, %v31, 0
  %83 = vmatprep.subr.mxu0 0.0
  %84 = vmatpush1.msra.mxu0 0.0
  %85 = vmatprep.subr.mxu0 0.0
  %86 = vmatpush1.msra.mxu0 0.0
  %87 = vmatprep.subr.mxu0 0.0
  %88 = vmatpush1.msra.mxu0 0.0
  %89 = vmatprep.subr.mxu0 0.0
  %90 = vmatpush1.msra.mxu0 0.0
  %91 = vmatprep.subr.mxu0 0.0
  %92 = vmatpush1.msra.mxu0 0.0
  %93 = vmatprep.subr.mxu0 0.0
  %94 = vmatpush1.msra.mxu0 0.0
  %95 = vmatprep.subr.mxu0 0.0
  %96 = vmatpush1.msra.mxu0 0.0
  %97 = vmatprep.subr.mxu0 0.0
  %98 = vmatpush1.msra.mxu0 0.0
  %99 = vmatprep.subr.mxu0 0.0
  %100 = vmatpush1.msra.mxu0 0.0
  %101 = vmatprep.subr.mxu0 0.0
  %102 = vmatpush1.msra.mxu0 0.0
  %103 = vmatprep.subr.mxu0 0.0
  %104 = vmatpush1.msra.mxu0 0.0
  %105 = vmatprep.subr.mxu0 0.0
  %106 = vmatpush1.msra.mxu0 0.0
  %107 = vmatprep.subr.mxu0 0.0
  %108 = vmatpush1.msra.mxu0 0.0
  %109 = vmatprep.subr.mxu0 0.0
  %110 = vmatpush1.msra.mxu0 0.0
  %111 = vmatprep.subr.mxu0 0.0
  %112 = vmatpush1.msra.mxu0 %v33
  %113 = vmatprep.subr.mxu0 0.0
  %114 = vmatpush1.msra.mxu0 %v32
  %115 = vmatprep.subr.mxu0 0.0
  %116 = vmatpush2.msra.mxu0 0.0
  %117 = vmatprep.subr.mxu0 0.0
  %118 = vmatpush2.msra.mxu0 0.0
  %119 = vmatprep.subr.mxu0 0.0
  %120 = vmatpush2.msra.mxu0 0.0
  %121 = vmatprep.subr.mxu0 0.0
  %122 = vmatpush2.msra.mxu0 0.0
  %123 = vmatprep.subr.mxu0 0.0
  %124 = vmatpush2.msra.mxu0 0.0
  %125 = vmatprep.subr.mxu0 0.0
  %126 = vmatpush2.msra.mxu0 0.0
  %127 = vmatprep.subr.mxu0 0.0
  %128 = vmatpush2.msra.mxu0 0.0
  %129 = vmatprep.subr.mxu0 0.0
  %130 = vmatpush2.msra.mxu0 0.0
  %131 = vmatprep.subr.mxu0 0.0
  %132 = vmatpush2.msra.mxu0 0.0
  %133 = vmatprep.subr.mxu0 0.0
  %134 = vmatpush2.msra.mxu0 0.0
  %135 = vmatprep.subr.mxu0 0.0
  %136 = vmatpush2.msra.mxu0 0.0
  %137 = vmatprep.subr.mxu0 0.0
  %138 = vmatpush2.msra.mxu0 0.0
  %139 = vmatprep.subr.mxu0 0.0
  %140 = vmatpush2.msra.mxu0 0.0
  %141 = vmatprep.subr.mxu0 0.0
  %142 = vmatpush2.msra.mxu0 0.0
  %143 = vmatprep.subr.mxu0 0.0
  %144 = vmatpush2.msra.mxu0 0.0
  %145 = vmatprep.subr.mxu0 0.0
  %146 = vmatpush2.msra.mxu0 0.0
  %147 = vmatprep.mubr.f32.mxu0 0.0
  %148 = vmatmul.mubr.f32.gmra.mxu0 %v36
  %v149 = vpop.f32.mrf.mxu0
  %v150 = vadd.f32 0.0, %v149
  %v151 = vpop.f32.mrf.mxu0
  %152 = vmatprep.mubr.f32.mxu0 0.0
  %153 = vmatmul.mubr.f32.gmra.mxu0 %v39
  %v154 = vpop.f32.mrf.mxu0
  %v155 = vadd.f32 0.0, %v154
  %v156 = vpop.f32.mrf.mxu0
  %157 = vmatprep.mubr.f32.mxu0 0.0
  %158 = vmatmul.mubr.f32.gmra.mxu0 %v42
  %v159 = vpop.f32.mrf.mxu0
  %v160 = vadd.f32 0.0, %v159
  %v161 = vpop.f32.mrf.mxu0
  %162 = vmatprep.mubr.f32.mxu0 0.0
  %163 = vmatmul.mubr.f32.gmra.mxu0 %v45
  %v164 = vpop.f32.mrf.mxu0
  %v165 = vadd.f32 0.0, %v164
  %v166 = vpop.f32.mrf.mxu0
  %167 = vmatprep.mubr.f32.mxu0 0.0
  %168 = vmatmul.mubr.f32.gmra.mxu0 %v48
  %v169 = vpop.f32.mrf.mxu0
  %v170 = vadd.f32 0.0, %v169
  %v171 = vpop.f32.mrf.mxu0
  %172 = vmatprep.mubr.f32.mxu0 0.0
  %173 = vmatmul.mubr.f32.gmra.mxu0 %v51
  %v174 = vpop.f32.mrf.mxu0
  %v175 = vadd.f32 0.0, %v174
  %v176 = vpop.f32.mrf.mxu0
  %177 = vmatprep.mubr.f32.mxu0 0.0
  %178 = vmatmul.mubr.f32.gmra.mxu0 %v54
  %v179 = vpop.f32.mrf.mxu0
  %v180 = vadd.f32 0.0, %v179
  %v181 = vpop.f32.mrf.mxu0
  %182 = vmatprep.mubr.f32.mxu0 0.0
  %183 = vmatmul.mubr.f32.gmra.mxu0 %v57
  %v184 = vpop.f32.mrf.mxu0
  %v185 = vadd.f32 0.0, %v184
  %v186 = vpop.f32.mrf.mxu0
  %187 = vmatprep.mubr.f32.mxu0 0.0
  %188 = vmatmul.mubr.f32.gmra.mxu0 %v60
  %v189 = vpop.f32.mrf.mxu0
  %v190 = vadd.f32 0.0, %v189
  %v191 = vpop.f32.mrf.mxu0
  %192 = vmatprep.mubr.f32.mxu0 0.0
  %193 = vmatmul.mubr.f32.gmra.mxu0 %v63
  %v194 = vpop.f32.mrf.mxu0
  %v195 = vadd.f32 0.0, %v194
  %v196 = vpop.f32.mrf.mxu0
  %197 = vmatprep.mubr.f32.mxu0 0.0
  %198 = vmatmul.mubr.f32.gmra.mxu0 %v66
  %v199 = vpop.f32.mrf.mxu0
  %v200 = vadd.f32 0.0, %v199
  %v201 = vpop.f32.mrf.mxu0
  %202 = vmatprep.mubr.f32.mxu0 0.0
  %203 = vmatmul.mubr.f32.gmra.mxu0 %v69
  %v204 = vpop.f32.mrf.mxu0
  %v205 = vadd.f32 0.0, %v204
  %v206 = vpop.f32.mrf.mxu0
  %207 = vmatprep.mubr.f32.mxu0 0.0
  %208 = vmatmul.mubr.f32.gmra.mxu0 %v72
  %v209 = vpop.f32.mrf.mxu0
  %v210 = vadd.f32 0.0, %v209
  %v211 = vpop.f32.mrf.mxu0
  %212 = vmatprep.mubr.f32.mxu0 0.0
  %213 = vmatmul.mubr.f32.gmra.mxu0 %v75
  %v214 = vpop.f32.mrf.mxu0
  %v215 = vadd.f32 0.0, %v214
  %v216 = vpop.f32.mrf.mxu0
  %217 = vmatprep.mubr.f32.mxu0 0.0
  %218 = vmatmul.mubr.f32.gmra.mxu0 %v78
  %v219 = vpop.f32.mrf.mxu0
  %v220 = vadd.f32 0.0, %v219
  %v221 = vpop.f32.mrf.mxu0
  %222 = vmatprep.mubr.f32.mxu0 0.0
  %223 = vmatmul.mubr.f32.gmra.mxu0 %v81
  %v224 = vpop.f32.mrf.mxu0
  %v225 = vadd.f32 0.0, %v224
  %v226 = vpop.f32.mrf.mxu0
  %227 = vdwg.mxu0
  %v228 = vpack.c.bf16 %v155, %v150
  %v229 = vpack.c.bf16 %v165, %v160
  %v230 = vpack.c.bf16 %v175, %v170
  %v231 = vpack.c.bf16 %v185, %v180
  %v232 = vpack.c.bf16 %v195, %v190
  %v233 = vpack.c.bf16 %v205, %v200
  %v234 = vpack.c.bf16 %v215, %v210
  %v235 = vpack.c.bf16 %v225, %v220
  %v244 = vunpack.c.l.b16 %v228
  %v245 = vunpack.c.h.b16 %v228
  %v246 = vunpack.c.l.b16 %v229
  %v247 = vunpack.c.h.b16 %v229
  %v248 = vunpack.c.l.b16 %v230
  %v249 = vunpack.c.h.b16 %v230
  %v250 = vunpack.c.l.b16 %v231
  %v251 = vunpack.c.h.b16 %v231
  %v252 = vunpack.c.l.b16 %v232
  %v253 = vunpack.c.h.b16 %v232
  %v254 = vunpack.c.l.b16 %v233
  %v255 = vunpack.c.h.b16 %v233
  %v256 = vunpack.c.l.b16 %v234
  %v257 = vunpack.c.h.b16 %v234
  %v258 = vunpack.c.l.b16 %v235
  %v259 = vunpack.c.h.b16 %v235
  %v260 = vpack.c.b16 %v244, %v244
  %v261 = vpack.c.b16 %v245, %v245
  %v262 = vpack.c.b16 %v246, %v246
  %v263 = vpack.c.b16 %v247, %v247
  %v264 = vpack.c.b16 %v248, %v248
  %v265 = vpack.c.b16 %v249, %v249
  %v266 = vpack.c.b16 %v250, %v250
  %v267 = vpack.c.b16 %v251, %v251
  %v268 = vpack.c.b16 %v252, %v252
  %v269 = vpack.c.b16 %v253, %v253
  %v270 = vpack.c.b16 %v254, %v254
  %v271 = vpack.c.b16 %v255, %v255
  %v272 = vpack.c.b16 %v256, %v256
  %v273 = vpack.c.b16 %v257, %v257
  %v274 = vpack.c.b16 %v258, %v258
  %v275 = vpack.c.b16 %v259, %v259
  %292 = vst [vmem:[%s3] sm:$0xf] %v260
  %293 = vst [vmem:[%s3 + $0x4] sm:$0xf] %v261
  %294 = vst [vmem:[%s3 + $0x8] sm:$0xf] %v262
  %295 = vst [vmem:[%s3 + $0xc] sm:$0xf] %v263
  %296 = vst [vmem:[%s3 + $0x10] sm:$0xf] %v264
  %297 = vst [vmem:[%s3 + $0x14] sm:$0xf] %v265
  %298 = vst [vmem:[%s3 + $0x18] sm:$0xf] %v266
  %299 = vst [vmem:[%s3 + $0x1c] sm:$0xf] %v267
  %300 = vst [vmem:[%s3 + $0x20] sm:$0xf] %v268
  %301 = vst [vmem:[%s3 + $0x24] sm:$0xf] %v269
  %302 = vst [vmem:[%s3 + $0x28] sm:$0xf] %v270
  %303 = vst [vmem:[%s3 + $0x2c] sm:$0xf] %v271
  %304 = vst [vmem:[%s3 + $0x30] sm:$0xf] %v272
  %305 = vst [vmem:[%s3 + $0x34] sm:$0xf] %v273
  %306 = vst [vmem:[%s3 + $0x38] sm:$0xf] %v274
  %307 = vst [vmem:[%s3 + $0x3c] sm:$0xf] %v275
  %v308 = vld [vmem:[%s2] sm:$0xff]
  %v309 = vld [vmem:[%s2 + $0x8] sm:$0xff]
  %v310 = vld [vmem:[%s2 + $0x10] sm:$0xff]
  %v311 = vld [vmem:[%s2 + $0x18] sm:$0xff]
  %v312 = vld [vmem:[%s2 + $0x20] sm:$0xff]
  %v313 = vld [vmem:[%s2 + $0x28] sm:$0xff]
  %v314 = vld [vmem:[%s2 + $0x30] sm:$0xff]
  %v315 = vld [vmem:[%s2 + $0x38] sm:$0xff]
  %v316 = vld [vmem:[%s2 + $0x40] sm:$0xff]
  %v317 = vld [vmem:[%s2 + $0x48] sm:$0xff]
  %v318 = vld [vmem:[%s2 + $0x50] sm:$0xff]
  %v319 = vld [vmem:[%s2 + $0x58] sm:$0xff]
  %v320 = vld [vmem:[%s2 + $0x60] sm:$0xff]
  %v321 = vld [vmem:[%s2 + $0x68] sm:$0xff]
  %v322 = vld [vmem:[%s2 + $0x70] sm:$0xff]
  %v323 = vld [vmem:[%s2 + $0x78] sm:$0xff]
  %324 = vmatprep.subr.mxu0 0.0
  %325 = vmatpush1.msra.mxu0 %v323
  %326 = vmatprep.subr.mxu0 0.0
  %327 = vmatpush1.msra.mxu0 %v322
  %328 = vmatprep.subr.mxu0 0.0
  %329 = vmatpush1.msra.mxu0 %v321
  %330 = vmatprep.subr.mxu0 0.0
  %331 = vmatpush1.msra.mxu0 %v320
  %332 = vmatprep.subr.mxu0 0.0
  %333 = vmatpush1.msra.mxu0 %v319
  %334 = vmatprep.subr.mxu0 0.0
  %335 = vmatpush1.msra.mxu0 %v318
  %336 = vmatprep.subr.mxu0 0.0
  %337 = vmatpush1.msra.mxu0 %v317
  %338 = vmatprep.subr.mxu0 0.0
  %339 = vmatpush1.msra.mxu0 %v316
  %340 = vmatprep.subr.mxu0 0.0
  %341 = vmatpush1.msra.mxu0 %v315
  %342 = vmatprep.subr.mxu0 0.0
  %343 = vmatpush1.msra.mxu0 %v314
  %344 = vmatprep.subr.mxu0 0.0
  %345 = vmatpush1.msra.mxu0 %v313
  %346 = vmatprep.subr.mxu0 0.0
  %347 = vmatpush1.msra.mxu0 %v312
  %348 = vmatprep.subr.mxu0 0.0
  %349 = vmatpush1.msra.mxu0 %v311
  %350 = vmatprep.subr.mxu0 0.0
  %351 = vmatpush1.msra.mxu0 %v310
  %352 = vmatprep.subr.mxu0 0.0
  %353 = vmatpush1.msra.mxu0 %v309
  %354 = vmatprep.subr.mxu0 0.0
  %355 = vmatpush1.msra.mxu0 %v308
  %356 = vmatprep.subr.mxu0 0.0
  %357 = vmatpush2.msra.mxu0 0.0
  %358 = vmatprep.subr.mxu0 0.0
  %359 = vmatpush2.msra.mxu0 0.0
  %360 = vmatprep.subr.mxu0 0.0
  %361 = vmatpush2.msra.mxu0 0.0
  %362 = vmatprep.subr.mxu0 0.0
  %363 = vmatpush2.msra.mxu0 0.0
  %364 = vmatprep.subr.mxu0 0.0
  %365 = vmatpush2.msra.mxu0 0.0
  %366 = vmatprep.subr.mxu0 0.0
  %367 = vmatpush2.msra.mxu0 0.0
  %368 = vmatprep.subr.mxu0 0.0
  %369 = vmatpush2.msra.mxu0 0.0
  %370 = vmatprep.subr.mxu0 0.0
  %371 = vmatpush2.msra.mxu0 0.0
  %372 = vmatprep.subr.mxu0 0.0
  %373 = vmatpush2.msra.mxu0 0.0
  %374 = vmatprep.subr.mxu0 0.0
  %375 = vmatpush2.msra.mxu0 0.0
  %376 = vmatprep.subr.mxu0 0.0
  %377 = vmatpush2.msra.mxu0 0.0
  %378 = vmatprep.subr.mxu0 0.0
  %379 = vmatpush2.msra.mxu0 0.0
  %380 = vmatprep.subr.mxu0 0.0
  %381 = vmatpush2.msra.mxu0 0.0
  %382 = vmatprep.subr.mxu0 0.0
  %383 = vmatpush2.msra.mxu0 0.0
  %384 = vmatprep.subr.mxu0 0.0
  %385 = vmatpush2.msra.mxu0 0.0
  %386 = vmatprep.subr.mxu0 0.0
  %387 = vmatpush2.msra.mxu0 0.0
  %388 = vmatprep.mubr.f32.mxu0 0.0
  %389 = vmatmul.mubr.f32.gmra.mxu0 %v150
  %v390 = vpop.f32.mrf.mxu0
  %v391 = vadd.f32 0.0, %v390
  %v392 = vpop.f32.mrf.mxu0
  %393 = vmatprep.mubr.f32.mxu0 0.0
  %394 = vmatmul.mubr.f32.gmra.mxu0 %v155
  %v395 = vpop.f32.mrf.mxu0
  %v396 = vadd.f32 0.0, %v395
  %v397 = vpop.f32.mrf.mxu0
  %398 = vmatprep.mubr.f32.mxu0 0.0
  %399 = vmatmul.mubr.f32.gmra.mxu0 %v160
  %v400 = vpop.f32.mrf.mxu0
  %v401 = vadd.f32 0.0, %v400
  %v402 = vpop.f32.mrf.mxu0
  %403 = vmatprep.mubr.f32.mxu0 0.0
  %404 = vmatmul.mubr.f32.gmra.mxu0 %v165
  %v405 = vpop.f32.mrf.mxu0
  %v406 = vadd.f32 0.0, %v405
  %v407 = vpop.f32.mrf.mxu0
  %408 = vmatprep.mubr.f32.mxu0 0.0
  %409 = vmatmul.mubr.f32.gmra.mxu0 %v170
  %v410 = vpop.f32.mrf.mxu0
  %v411 = vadd.f32 0.0, %v410
  %v412 = vpop.f32.mrf.mxu0
  %413 = vmatprep.mubr.f32.mxu0 0.0
  %414 = vmatmul.mubr.f32.gmra.mxu0 %v175
  %v415 = vpop.f32.mrf.mxu0
  %v416 = vadd.f32 0.0, %v415
  %v417 = vpop.f32.mrf.mxu0
  %418 = vmatprep.mubr.f32.mxu0 0.0
  %419 = vmatmul.mubr.f32.gmra.mxu0 %v180
  %v420 = vpop.f32.mrf.mxu0
  %v421 = vadd.f32 0.0, %v420
  %v422 = vpop.f32.mrf.mxu0
  %423 = vmatprep.mubr.f32.mxu0 0.0
  %424 = vmatmul.mubr.f32.gmra.mxu0 %v185
  %v425 = vpop.f32.mrf.mxu0
  %v426 = vadd.f32 0.0, %v425
  %v427 = vpop.f32.mrf.mxu0
  %428 = vmatprep.mubr.f32.mxu0 0.0
  %429 = vmatmul.mubr.f32.gmra.mxu0 %v190
  %v430 = vpop.f32.mrf.mxu0
  %v431 = vadd.f32 0.0, %v430
  %v432 = vpop.f32.mrf.mxu0
  %433 = vmatprep.mubr.f32.mxu0 0.0
  %434 = vmatmul.mubr.f32.gmra.mxu0 %v195
  %v435 = vpop.f32.mrf.mxu0
  %v436 = vadd.f32 0.0, %v435
  %v437 = vpop.f32.mrf.mxu0
  %438 = vmatprep.mubr.f32.mxu0 0.0
  %439 = vmatmul.mubr.f32.gmra.mxu0 %v200
  %v440 = vpop.f32.mrf.mxu0
  %v441 = vadd.f32 0.0, %v440
  %v442 = vpop.f32.mrf.mxu0
  %443 = vmatprep.mubr.f32.mxu0 0.0
  %444 = vmatmul.mubr.f32.gmra.mxu0 %v205
  %v445 = vpop.f32.mrf.mxu0
  %v446 = vadd.f32 0.0, %v445
  %v447 = vpop.f32.mrf.mxu0
  %448 = vmatprep.mubr.f32.mxu0 0.0
  %449 = vmatmul.mubr.f32.gmra.mxu0 %v210
  %v450 = vpop.f32.mrf.mxu0
  %v451 = vadd.f32 0.0, %v450
  %v452 = vpop.f32.mrf.mxu0
  %453 = vmatprep.mubr.f32.mxu0 0.0
  %454 = vmatmul.mubr.f32.gmra.mxu0 %v215
  %v455 = vpop.f32.mrf.mxu0
  %v456 = vadd.f32 0.0, %v455
  %v457 = vpop.f32.mrf.mxu0
  %458 = vmatprep.mubr.f32.mxu0 0.0
  %459 = vmatmul.mubr.f32.gmra.mxu0 %v220
  %v460 = vpop.f32.mrf.mxu0
  %v461 = vadd.f32 0.0, %v460
  %v462 = vpop.f32.mrf.mxu0
  %463 = vmatprep.mubr.f32.mxu0 0.0
  %464 = vmatmul.mubr.f32.gmra.mxu0 %v225
  %v465 = vpop.f32.mrf.mxu0
  %v466 = vadd.f32 0.0, %v465
  %v467 = vpop.f32.mrf.mxu0
  %468 = vdwg.mxu0
  %vm469 = vcmask 15360
  %470 = vst.msk [vmem:[%s4] sm:$0xff] %vm469, %v391
  %471 = vst.msk [vmem:[%s4 + $0x8] sm:$0xff] %vm469, %v396
  %472 = vst.msk [vmem:[%s4 + $0x10] sm:$0xff] %vm469, %v401
  %473 = vst.msk [vmem:[%s4 + $0x18] sm:$0xff] %vm469, %v406
  %474 = vst.msk [vmem:[%s4 + $0x20] sm:$0xff] %vm469, %v411
  %475 = vst.msk [vmem:[%s4 + $0x28] sm:$0xff] %vm469, %v416
  %476 = vst.msk [vmem:[%s4 + $0x30] sm:$0xff] %vm469, %v421
  %477 = vst.msk [vmem:[%s4 + $0x38] sm:$0xff] %vm469, %v426
  %478 = vst.msk [vmem:[%s4 + $0x40] sm:$0xff] %vm469, %v431
  %479 = vst.msk [vmem:[%s4 + $0x48] sm:$0xff] %vm469, %v436
  %480 = vst.msk [vmem:[%s4 + $0x50] sm:$0xff] %vm469, %v441
  %481 = vst.msk [vmem:[%s4 + $0x58] sm:$0xff] %vm469, %v446
  %482 = vst.msk [vmem:[%s4 + $0x60] sm:$0xff] %vm469, %v451
  %483 = vst.msk [vmem:[%s4 + $0x68] sm:$0xff] %vm469, %v456
  %484 = vst.msk [vmem:[%s4 + $0x70] sm:$0xff] %vm469, %v461
  %485 = vst.msk [vmem:[%s4 + $0x78] sm:$0xff] %vm469, %v466
  // Predicated region
  $region14: #{gat_layer_pallas.2} parent=0 // pred_check
    _
  $region15: #{gat_layer_pallas.2} parent=0 // pred_check_branch
    %487 = sbr.rel (0) target = $region17
  $region16: #{gat_layer_pallas.2} parent=0 // pred_region
    _
  $region17: #{gat_layer_pallas.2} parent=0 // pred_fallthru
    _
  // Predicated region
  $region18: #{gat_layer_pallas.2} parent=0 // pred_check
    _
  $region19: #{gat_layer_pallas.2} parent=0 // pred_check_branch
    %489 = sbr.rel (0) target = $region21
  $region20: #{gat_layer_pallas.2} parent=0 // pred_region
    _
  $region21: #{gat_layer_pallas.2} parent=0 // pred_fallthru
    _
  // Predicated region
  $region22: #{gat_layer_pallas.2} parent=0 // pred_check
    _
  $region23: #{gat_layer_pallas.2} parent=0 // pred_check_branch
    %491 = sbr.rel (0) target = $region25
  $region24: #{gat_layer_pallas.2} parent=0 // pred_region
    _
  $region25: #{gat_layer_pallas.2} parent=0 // pred_fallthru
    _
  // Predicated region
  $region26: #{gat_layer_pallas.2} parent=0 // pred_check
    _
  $region27: #{gat_layer_pallas.2} parent=0 // pred_check_branch
    %493 = sbr.rel (0) target = $region29
  $region28: #{gat_layer_pallas.2} parent=0 // pred_region
    _
  $region29: #{gat_layer_pallas.2} parent=0 // pred_fallthru
    _

// kernel: gat_layer_pallas.3
$region0: #{gat_layer_pallas.3}
  #allocation0 [shape = 'u32[]', space=smem, size = 0x4, offset = 0x4, fixed_abs, tag = 'smem constant byte address 0x4 - core index']
  #allocation1 [shape = 'u32[144,128]{1,0:T(1,128)}', space=vmem, size = 0x12000, scoped, tag = 'internal scratch']
  #allocation2 [shape = 'f32[128,1]{1,0:T(8,128)}', space=vmem, size = 0x10000, scoped, tag = 'scratch operand']
  #allocation3 [shape = 'f32[128,1]{1,0:T(8,128)}', space=vmem, size = 0x10000, scoped, tag = 'scratch operand']
  #allocation4 [shape = 'f32[128,128]{1,0:T(8,128)}', space=vmem, size = 0x10000, scoped, tag = 'scratch operand']
  %s0 = inlined_call_operand.vmem [shape: f32[128,1], index: 0, kind: input, shape index: {}]
  %s1 = inlined_call_operand.vmem [shape: f32[1,128], index: 1, kind: input, shape index: {}]
  %s2 = inlined_call_operand.vmem [shape: s8[128,128], index: 2, kind: input, shape index: {}]
  %s3 = inlined_call_operand.vmem [shape: bf16[128,128], index: 3, kind: input, shape index: {}]
  %s4 = inlined_call_operand.vmem [shape: f32[128,128], index: 4, kind: output, shape index: {}]
  %s5 = sld [smem:[#allocation0]]
  $region34: #{gat_layer_pallas.3} parent=0
    _
  %s7 = ssub.s32 1, %s5
  %s8 = scalar_select 0, %s7, %s5
  // Predicated region
  $region2: #{gat_layer_pallas.3} parent=0 // pred_check
    _
  $region3: #{gat_layer_pallas.3} parent=0 // pred_check_branch
    %10 = sbr.rel (0) target = $region5
  $region4: #{gat_layer_pallas.3} parent=0 // pred_region
    _
  $region5: #{gat_layer_pallas.3} parent=0 // pred_fallthru
    _
  // Predicated region
  $region6: #{gat_layer_pallas.3} parent=0 // pred_check
    _
  $region7: #{gat_layer_pallas.3} parent=0 // pred_check_branch
    %12 = sbr.rel (0) target = $region9
  $region8: #{gat_layer_pallas.3} parent=0 // pred_region
    _
  $region9: #{gat_layer_pallas.3} parent=0 // pred_fallthru
    _
  // Predicated region
  $region10: #{gat_layer_pallas.3} parent=0 // pred_check
    _
  $region11: #{gat_layer_pallas.3} parent=0 // pred_check_branch
    %14 = sbr.rel (0) target = $region13
  $region12: #{gat_layer_pallas.3} parent=0 // pred_region
    _
  $region13: #{gat_layer_pallas.3} parent=0 // pred_fallthru
    _
  // Predicated region
  $region14: #{gat_layer_pallas.3} parent=0 // pred_check
    _
  $region15: #{gat_layer_pallas.3} parent=0 // pred_check_branch
    %16 = sbr.rel (0) target = $region17
  $region16: #{gat_layer_pallas.3} parent=0 // pred_region
    _
  $region17: #{gat_layer_pallas.3} parent=0 // pred_fallthru
    _
  %p18 = scmp.eq.s32.totalorder 0, 0
  // Predicated region
  $region18: #{gat_layer_pallas.3} parent=0 // pred_check
    %p19 = pneg %p18
  $region19: #{gat_layer_pallas.3} parent=0 // pred_check_branch
    %21 = sbr.rel (%p19) target = $region21
  $region20: #{gat_layer_pallas.3} parent=0 // pred_region
    %vm22 = vcmask 7168
    %23 = vst.msk [vmem:[#allocation2] sm:$0xff] %vm22, -1e+30
    %24 = vst.msk [vmem:[#allocation2 + $0x8] sm:$0xff] %vm22, -1e+30
    %25 = vst.msk [vmem:[#allocation2 + $0x10] sm:$0xff] %vm22, -1e+30
    %26 = vst.msk [vmem:[#allocation2 + $0x18] sm:$0xff] %vm22, -1e+30
    %27 = vst.msk [vmem:[#allocation2 + $0x20] sm:$0xff] %vm22, -1e+30
    %28 = vst.msk [vmem:[#allocation2 + $0x28] sm:$0xff] %vm22, -1e+30
    %29 = vst.msk [vmem:[#allocation2 + $0x30] sm:$0xff] %vm22, -1e+30
    %30 = vst.msk [vmem:[#allocation2 + $0x38] sm:$0xff] %vm22, -1e+30
    %31 = vst.msk [vmem:[#allocation2 + $0x40] sm:$0xff] %vm22, -1e+30
    %32 = vst.msk [vmem:[#allocation2 + $0x48] sm:$0xff] %vm22, -1e+30
    %33 = vst.msk [vmem:[#allocation2 + $0x50] sm:$0xff] %vm22, -1e+30
    %34 = vst.msk [vmem:[#allocation2 + $0x58] sm:$0xff] %vm22, -1e+30
    %35 = vst.msk [vmem:[#allocation2 + $0x60] sm:$0xff] %vm22, -1e+30
    %36 = vst.msk [vmem:[#allocation2 + $0x68] sm:$0xff] %vm22, -1e+30
    %37 = vst.msk [vmem:[#allocation2 + $0x70] sm:$0xff] %vm22, -1e+30
    %38 = vst.msk [vmem:[#allocation2 + $0x78] sm:$0xff] %vm22, -1e+30
    %39 = vst.msk [vmem:[#allocation3] sm:$0xff] %vm22, 0.0
    %40 = vst.msk [vmem:[#allocation3 + $0x8] sm:$0xff] %vm22, 0.0
    %41 = vst.msk [vmem:[#allocation3 + $0x10] sm:$0xff] %vm22, 0.0
    %42 = vst.msk [vmem:[#allocation3 + $0x18] sm:$0xff] %vm22, 0.0
    %43 = vst.msk [vmem:[#allocation3 + $0x20] sm:$0xff] %vm22, 0.0
    %44 = vst.msk [vmem:[#allocation3 + $0x28] sm:$0xff] %vm22, 0.0
    %45 = vst.msk [vmem:[#allocation3 + $0x30] sm:$0xff] %vm22, 0.0
    %46 = vst.msk [vmem:[#allocation3 + $0x38] sm:$0xff] %vm22, 0.0
    %47 = vst.msk [vmem:[#allocation3 + $0x40] sm:$0xff] %vm22, 0.0
    %48 = vst.msk [vmem:[#allocation3 + $0x48] sm:$0xff] %vm22, 0.0
    %49 = vst.msk [vmem:[#allocation3 + $0x50] sm:$0xff] %vm22, 0.0
    %50 = vst.msk [vmem:[#allocation3 + $0x58] sm:$0xff] %vm22, 0.0
    %51 = vst.msk [vmem:[#allocation3 + $0x60] sm:$0xff] %vm22, 0.0
    %52 = vst.msk [vmem:[#allocation3 + $0x68] sm:$0xff] %vm22, 0.0
    %53 = vst.msk [vmem:[#allocation3 + $0x70] sm:$0xff] %vm22, 0.0
    %54 = vst.msk [vmem:[#allocation3 + $0x78] sm:$0xff] %vm22, 0.0
    %55 = vst [vmem:[#allocation4] sm:$0xff] 0.0
    %56 = vst [vmem:[#allocation4 + $0x8] sm:$0xff] 0.0
    %57 = vst [vmem:[#allocation4 + $0x10] sm:$0xff] 0.0
    %58 = vst [vmem:[#allocation4 + $0x18] sm:$0xff] 0.0
    %59 = vst [vmem:[#allocation4 + $0x20] sm:$0xff] 0.0
    %60 = vst [vmem:[#allocation4 + $0x28] sm:$0xff] 0.0
    %61 = vst [vmem:[#allocation4 + $0x30] sm:$0xff] 0.0
    %62 = vst [vmem:[#allocation4 + $0x38] sm:$0xff] 0.0
    %63 = vst [vmem:[#allocation4 + $0x40] sm:$0xff] 0.0
    %64 = vst [vmem:[#allocation4 + $0x48] sm:$0xff] 0.0
    %65 = vst [vmem:[#allocation4 + $0x50] sm:$0xff] 0.0
    %66 = vst [vmem:[#allocation4 + $0x58] sm:$0xff] 0.0
    %67 = vst [vmem:[#allocation4 + $0x60] sm:$0xff] 0.0
    %68 = vst [vmem:[#allocation4 + $0x68] sm:$0xff] 0.0
    %69 = vst [vmem:[#allocation4 + $0x70] sm:$0xff] 0.0
    %70 = vst [vmem:[#allocation4 + $0x78] sm:$0xff] 0.0
  $region21: #{gat_layer_pallas.3} parent=0 // pred_fallthru
    _
  %v71 = vld [vmem:[%s2] sm:$0x3]
  %v72 = vld [vmem:[%s2 + $0x2] sm:$0x3]
  %v73 = vld [vmem:[%s2 + $0x4] sm:$0x3]
  %v74 = vld [vmem:[%s2 + $0x6] sm:$0x3]
  %v75 = vld [vmem:[%s2 + $0x8] sm:$0x3]
  %v76 = vld [vmem:[%s2 + $0xa] sm:$0x3]
  %v77 = vld [vmem:[%s2 + $0xc] sm:$0x3]
  %v78 = vld [vmem:[%s2 + $0xe] sm:$0x3]
  %v79 = vld [vmem:[%s2 + $0x10] sm:$0x3]
  %v80 = vld [vmem:[%s2 + $0x12] sm:$0x3]
  %v81 = vld [vmem:[%s2 + $0x14] sm:$0x3]
  %v82 = vld [vmem:[%s2 + $0x16] sm:$0x3]
  %v83 = vld [vmem:[%s2 + $0x18] sm:$0x3]
  %v84 = vld [vmem:[%s2 + $0x1a] sm:$0x3]
  %v85 = vld [vmem:[%s2 + $0x1c] sm:$0x3]
  %v86 = vld [vmem:[%s2 + $0x1e] sm:$0x3]
  %v87 = vunpack.c.0.s8 %v71
  %v88 = vunpack.c.0.s8 %v72
  %v89 = vunpack.c.0.s8 %v73
  %v90 = vunpack.c.0.s8 %v74
  %v91 = vunpack.c.0.s8 %v75
  %v92 = vunpack.c.0.s8 %v76
  %v93 = vunpack.c.0.s8 %v77
  %v94 = vunpack.c.0.s8 %v78
  %v95 = vunpack.c.0.s8 %v79
  %v96 = vunpack.c.0.s8 %v80
  %v97 = vunpack.c.0.s8 %v81
  %v98 = vunpack.c.0.s8 %v82
  %v99 = vunpack.c.0.s8 %v83
  %v100 = vunpack.c.0.s8 %v84
  %v101 = vunpack.c.0.s8 %v85
  %v102 = vunpack.c.0.s8 %v86
  %v103 = vcvt.s32.f32 %v87
  %v104 = vcvt.s32.f32 %v88
  %v105 = vcvt.s32.f32 %v89
  %v106 = vcvt.s32.f32 %v90
  %v107 = vcvt.s32.f32 %v91
  %v108 = vcvt.s32.f32 %v92
  %v109 = vcvt.s32.f32 %v93
  %v110 = vcvt.s32.f32 %v94
  %v111 = vcvt.s32.f32 %v95
  %v112 = vcvt.s32.f32 %v96
  %v113 = vcvt.s32.f32 %v97
  %v114 = vcvt.s32.f32 %v98
  %v115 = vcvt.s32.f32 %v99
  %v116 = vcvt.s32.f32 %v100
  %v117 = vcvt.s32.f32 %v101
  %v118 = vcvt.s32.f32 %v102
  %v119 = vld [vmem:[%s0] sm:$0xff]
  %v120 = vld [vmem:[%s0 + $0x8] sm:$0xff]
  %v121 = vld [vmem:[%s0 + $0x10] sm:$0xff]
  %v122 = vld [vmem:[%s0 + $0x18] sm:$0xff]
  %v123 = vld [vmem:[%s0 + $0x20] sm:$0xff]
  %v124 = vld [vmem:[%s0 + $0x28] sm:$0xff]
  %v125 = vld [vmem:[%s0 + $0x30] sm:$0xff]
  %v126 = vld [vmem:[%s0 + $0x38] sm:$0xff]
  %v127 = vld [vmem:[%s0 + $0x40] sm:$0xff]
  %v128 = vld [vmem:[%s0 + $0x48] sm:$0xff]
  %v129 = vld [vmem:[%s0 + $0x50] sm:$0xff]
  %v130 = vld [vmem:[%s0 + $0x58] sm:$0xff]
  %v131 = vld [vmem:[%s0 + $0x60] sm:$0xff]
  %v132 = vld [vmem:[%s0 + $0x68] sm:$0xff]
  %v133 = vld [vmem:[%s0 + $0x70] sm:$0xff]
  %v134 = vld [vmem:[%s0 + $0x78] sm:$0xff]
  %v135 = vld [vmem:[%s1] sm:$0x1]
  %137 = vset.pattern.permute.xlu0 0
  %138 = vperm.xlu0 %137, %v119
  %v139 = vpop.permute.xlu0 %138
  %142 = vset.pattern.permute.xlu0 0
  %143 = vperm.xlu0 %142, %v120
  %v144 = vpop.permute.xlu0 %143
  %147 = vset.pattern.permute.xlu0 0
  %148 = vperm.xlu0 %147, %v121
  %v149 = vpop.permute.xlu0 %148
  %152 = vset.pattern.permute.xlu0 0
  %153 = vperm.xlu0 %152, %v122
  %v154 = vpop.permute.xlu0 %153
  %157 = vset.pattern.permute.xlu0 0
  %158 = vperm.xlu0 %157, %v123
  %v159 = vpop.permute.xlu0 %158
  %162 = vset.pattern.permute.xlu0 0
  %163 = vperm.xlu0 %162, %v124
  %v164 = vpop.permute.xlu0 %163
  %167 = vset.pattern.permute.xlu0 0
  %168 = vperm.xlu0 %167, %v125
  %v169 = vpop.permute.xlu0 %168
  %172 = vset.pattern.permute.xlu0 0
  %173 = vperm.xlu0 %172, %v126
  %v174 = vpop.permute.xlu0 %173
  %177 = vset.pattern.permute.xlu0 0
  %178 = vperm.xlu0 %177, %v127
  %v179 = vpop.permute.xlu0 %178
  %182 = vset.pattern.permute.xlu0 0
  %183 = vperm.xlu0 %182, %v128
  %v184 = vpop.permute.xlu0 %183
  %187 = vset.pattern.permute.xlu0 0
  %188 = vperm.xlu0 %187, %v129
  %v189 = vpop.permute.xlu0 %188
  %192 = vset.pattern.permute.xlu0 0
  %193 = vperm.xlu0 %192, %v130
  %v194 = vpop.permute.xlu0 %193
  %197 = vset.pattern.permute.xlu0 0
  %198 = vperm.xlu0 %197, %v131
  %v199 = vpop.permute.xlu0 %198
  %202 = vset.pattern.permute.xlu0 0
  %203 = vperm.xlu0 %202, %v132
  %v204 = vpop.permute.xlu0 %203
  %207 = vset.pattern.permute.xlu0 0
  %208 = vperm.xlu0 %207, %v133
  %v209 = vpop.permute.xlu0 %208
  %212 = vset.pattern.permute.xlu0 0
  %213 = vperm.xlu0 %212, %v134
  %v214 = vpop.permute.xlu0 %213
  %v217 = vlaneseq
  %v218 = vshrl.u32 %v217, 7
  %v219 = vsub.s32 0, %v218
  %v220 = vrot.slane %v135, %v219
  %v222 = vadd.f32 %v139, %v220
  %v223 = vadd.f32 %v144, %v220
  %v224 = vadd.f32 %v149, %v220
  %v225 = vadd.f32 %v154, %v220
  %v226 = vadd.f32 %v159, %v220
  %v227 = vadd.f32 %v164, %v220
  %v228 = vadd.f32 %v169, %v220
  %v229 = vadd.f32 %v174, %v220
  %v230 = vadd.f32 %v179, %v220
  %v231 = vadd.f32 %v184, %v220
  %v232 = vadd.f32 %v189, %v220
  %v233 = vadd.f32 %v194, %v220
  %v234 = vadd.f32 %v199, %v220
  %v235 = vadd.f32 %v204, %v220
  %v236 = vadd.f32 %v209, %v220
  %v237 = vadd.f32 %v214, %v220
  %v238 = vmul.f32 %v222, 0.01
  %v239 = vmul.f32 %v223, 0.01
  %v240 = vmul.f32 %v224, 0.01
  %v241 = vmul.f32 %v225, 0.01
  %v242 = vmul.f32 %v226, 0.01
  %v243 = vmul.f32 %v227, 0.01
  %v244 = vmul.f32 %v228, 0.01
  %v245 = vmul.f32 %v229, 0.01
  %v246 = vmul.f32 %v230, 0.01
  %v247 = vmul.f32 %v231, 0.01
  %v248 = vmul.f32 %v232, 0.01
  %v249 = vmul.f32 %v233, 0.01
  %v250 = vmul.f32 %v234, 0.01
  %v251 = vmul.f32 %v235, 0.01
  %v252 = vmul.f32 %v236, 0.01
  %v253 = vmul.f32 %v237, 0.01
  %v254 = vmax.f32 %v222, %v238
  %v255 = vmax.f32 %v223, %v239
  %v256 = vmax.f32 %v224, %v240
  %v257 = vmax.f32 %v225, %v241
  %v258 = vmax.f32 %v226, %v242
  %v259 = vmax.f32 %v227, %v243
  %v260 = vmax.f32 %v228, %v244
  %v261 = vmax.f32 %v229, %v245
  %v262 = vmax.f32 %v230, %v246
  %v263 = vmax.f32 %v231, %v247
  %v264 = vmax.f32 %v232, %v248
  %v265 = vmax.f32 %v233, %v249
  %v266 = vmax.f32 %v234, %v250
  %v267 = vmax.f32 %v235, %v251
  %v268 = vmax.f32 %v236, %v252
  %v269 = vmax.f32 %v237, %v253
  %vm270 = vcmp.gt.f32.partialorder %v103, 0.0
  %vm271 = vcmp.gt.f32.partialorder %v104, 0.0
  %vm272 = vcmp.gt.f32.partialorder %v105, 0.0
  %vm273 = vcmp.gt.f32.partialorder %v106, 0.0
  %vm274 = vcmp.gt.f32.partialorder %v107, 0.0
  %vm275 = vcmp.gt.f32.partialorder %v108, 0.0
  %vm276 = vcmp.gt.f32.partialorder %v109, 0.0
  %vm277 = vcmp.gt.f32.partialorder %v110, 0.0
  %vm278 = vcmp.gt.f32.partialorder %v111, 0.0
  %vm279 = vcmp.gt.f32.partialorder %v112, 0.0
  %vm280 = vcmp.gt.f32.partialorder %v113, 0.0
  %vm281 = vcmp.gt.f32.partialorder %v114, 0.0
  %vm282 = vcmp.gt.f32.partialorder %v115, 0.0
  %vm283 = vcmp.gt.f32.partialorder %v116, 0.0
  %vm284 = vcmp.gt.f32.partialorder %v117, 0.0
  %vm285 = vcmp.gt.f32.partialorder %v118, 0.0
  %v286 = vsel %vm270, %v254, -1e+30
  %v287 = vsel %vm271, %v255, -1e+30
  %v288 = vsel %vm272, %v256, -1e+30
  %v289 = vsel %vm273, %v257, -1e+30
  %v290 = vsel %vm274, %v258, -1e+30
  %v291 = vsel %vm275, %v259, -1e+30
  %v292 = vsel %vm276, %v260, -1e+30
  %v293 = vsel %vm277, %v261, -1e+30
  %v294 = vsel %vm278, %v262, -1e+30
  %v295 = vsel %vm279, %v263, -1e+30
  %v296 = vsel %vm280, %v264, -1e+30
  %v297 = vsel %vm281, %v265, -1e+30
  %v298 = vsel %vm282, %v266, -1e+30
  %v299 = vsel %vm283, %v267, -1e+30
  %v300 = vsel %vm284, %v268, -1e+30
  %v301 = vsel %vm285, %v269, -1e+30
  %v302 = vld [vmem:[#allocation2] sm:$0xff]
  %v303 = vld [vmem:[#allocation2 + $0x8] sm:$0xff]
  %v304 = vld [vmem:[#allocation2 + $0x10] sm:$0xff]
  %v305 = vld [vmem:[#allocation2 + $0x18] sm:$0xff]
  %v306 = vld [vmem:[#allocation2 + $0x20] sm:$0xff]
  %v307 = vld [vmem:[#allocation2 + $0x28] sm:$0xff]
  %v308 = vld [vmem:[#allocation2 + $0x30] sm:$0xff]
  %v309 = vld [vmem:[#allocation2 + $0x38] sm:$0xff]
  %v310 = vld [vmem:[#allocation2 + $0x40] sm:$0xff]
  %v311 = vld [vmem:[#allocation2 + $0x48] sm:$0xff]
  %v312 = vld [vmem:[#allocation2 + $0x50] sm:$0xff]
  %v313 = vld [vmem:[#allocation2 + $0x58] sm:$0xff]
  %v314 = vld [vmem:[#allocation2 + $0x60] sm:$0xff]
  %v315 = vld [vmem:[#allocation2 + $0x68] sm:$0xff]
  %v316 = vld [vmem:[#allocation2 + $0x70] sm:$0xff]
  %v317 = vld [vmem:[#allocation2 + $0x78] sm:$0xff]
  %318 = vmax.xlane.f32.xlu0 %v286
  %v319 = vpop.xlane.xlu0 %318
  %320 = vmax.xlane.f32.xlu0 %v287
  %v321 = vpop.xlane.xlu0 %320
  %322 = vmax.xlane.f32.xlu0 %v288
  %v323 = vpop.xlane.xlu0 %322
  %324 = vmax.xlane.f32.xlu0 %v289
  %v325 = vpop.xlane.xlu0 %324
  %326 = vmax.xlane.f32.xlu0 %v290
  %v327 = vpop.xlane.xlu0 %326
  %328 = vmax.xlane.f32.xlu0 %v291
  %v329 = vpop.xlane.xlu0 %328
  %330 = vmax.xlane.f32.xlu0 %v292
  %v331 = vpop.xlane.xlu0 %330
  %332 = vmax.xlane.f32.xlu0 %v293
  %v333 = vpop.xlane.xlu0 %332
  %334 = vmax.xlane.f32.xlu0 %v294
  %v335 = vpop.xlane.xlu0 %334
  %336 = vmax.xlane.f32.xlu0 %v295
  %v337 = vpop.xlane.xlu0 %336
  %338 = vmax.xlane.f32.xlu0 %v296
  %v339 = vpop.xlane.xlu0 %338
  %340 = vmax.xlane.f32.xlu0 %v297
  %v341 = vpop.xlane.xlu0 %340
  %342 = vmax.xlane.f32.xlu0 %v298
  %v343 = vpop.xlane.xlu0 %342
  %344 = vmax.xlane.f32.xlu0 %v299
  %v345 = vpop.xlane.xlu0 %344
  %346 = vmax.xlane.f32.xlu0 %v300
  %v347 = vpop.xlane.xlu0 %346
  %348 = vmax.xlane.f32.xlu0 %v301
  %v349 = vpop.xlane.xlu0 %348
  %v350 = vmax.f32 %v302, %v319
  %v351 = vmax.f32 %v303, %v321
  %v352 = vmax.f32 %v304, %v323
  %v353 = vmax.f32 %v305, %v325
  %v354 = vmax.f32 %v306, %v327
  %v355 = vmax.f32 %v307, %v329
  %v356 = vmax.f32 %v308, %v331
  %v357 = vmax.f32 %v309, %v333
  %v358 = vmax.f32 %v310, %v335
  %v359 = vmax.f32 %v311, %v337
  %v360 = vmax.f32 %v312, %v339
  %v361 = vmax.f32 %v313, %v341
  %v362 = vmax.f32 %v314, %v343
  %v363 = vmax.f32 %v315, %v345
  %v364 = vmax.f32 %v316, %v347
  %v365 = vmax.f32 %v317, %v349
  %v366 = vsub.f32 %v302, %v350
  %v367 = vsub.f32 %v303, %v351
  %v368 = vsub.f32 %v304, %v352
  %v369 = vsub.f32 %v305, %v353
  %v370 = vsub.f32 %v306, %v354
  %v371 = vsub.f32 %v307, %v355
  %v372 = vsub.f32 %v308, %v356
  %v373 = vsub.f32 %v309, %v357
  %v374 = vsub.f32 %v310, %v358
  %v375 = vsub.f32 %v311, %v359
  %v376 = vsub.f32 %v312, %v360
  %v377 = vsub.f32 %v313, %v361
  %v378 = vsub.f32 %v314, %v362
  %v379 = vsub.f32 %v315, %v363
  %v380 = vsub.f32 %v316, %v364
  %v381 = vsub.f32 %v317, %v365
  %v382 = vmul.f32 %v366, 1.442695
  %v383 = vpow.pop %v382
  %v384 = vmul.f32 %v367, 1.442695
  %v385 = vpow.pop %v384
  %v386 = vmul.f32 %v368, 1.442695
  %v387 = vpow.pop %v386
  %v388 = vmul.f32 %v369, 1.442695
  %v389 = vpow.pop %v388
  %v390 = vmul.f32 %v370, 1.442695
  %v391 = vpow.pop %v390
  %v392 = vmul.f32 %v371, 1.442695
  %v393 = vpow.pop %v392
  %v394 = vmul.f32 %v372, 1.442695
  %v395 = vpow.pop %v394
  %v396 = vmul.f32 %v373, 1.442695
  %v397 = vpow.pop %v396
  %v398 = vmul.f32 %v374, 1.442695
  %v399 = vpow.pop %v398
  %v400 = vmul.f32 %v375, 1.442695
  %v401 = vpow.pop %v400
  %v402 = vmul.f32 %v376, 1.442695
  %v403 = vpow.pop %v402
  %v404 = vmul.f32 %v377, 1.442695
  %v405 = vpow.pop %v404
  %v406 = vmul.f32 %v378, 1.442695
  %v407 = vpow.pop %v406
  %v408 = vmul.f32 %v379, 1.442695
  %v409 = vpow.pop %v408
  %v410 = vmul.f32 %v380, 1.442695
  %v411 = vpow.pop %v410
  %v412 = vmul.f32 %v381, 1.442695
  %v413 = vpow.pop %v412
  %415 = vset.pattern.permute.xlu0 0
  %416 = vperm.xlu0 %415, %v350
  %v417 = vpop.permute.xlu0 %416
  %420 = vset.pattern.permute.xlu0 0
  %421 = vperm.xlu0 %420, %v351
  %v422 = vpop.permute.xlu0 %421
  %425 = vset.pattern.permute.xlu0 0
  %426 = vperm.xlu0 %425, %v352
  %v427 = vpop.permute.xlu0 %426
  %430 = vset.pattern.permute.xlu0 0
  %431 = vperm.xlu0 %430, %v353
  %v432 = vpop.permute.xlu0 %431
  %435 = vset.pattern.permute.xlu0 0
  %436 = vperm.xlu0 %435, %v354
  %v437 = vpop.permute.xlu0 %436
  %440 = vset.pattern.permute.xlu0 0
  %441 = vperm.xlu0 %440, %v355
  %v442 = vpop.permute.xlu0 %441
  %445 = vset.pattern.permute.xlu0 0
  %446 = vperm.xlu0 %445, %v356
  %v447 = vpop.permute.xlu0 %446
  %450 = vset.pattern.permute.xlu0 0
  %451 = vperm.xlu0 %450, %v357
  %v452 = vpop.permute.xlu0 %451
  %455 = vset.pattern.permute.xlu0 0
  %456 = vperm.xlu0 %455, %v358
  %v457 = vpop.permute.xlu0 %456
  %460 = vset.pattern.permute.xlu0 0
  %461 = vperm.xlu0 %460, %v359
  %v462 = vpop.permute.xlu0 %461
  %465 = vset.pattern.permute.xlu0 0
  %466 = vperm.xlu0 %465, %v360
  %v467 = vpop.permute.xlu0 %466
  %470 = vset.pattern.permute.xlu0 0
  %471 = vperm.xlu0 %470, %v361
  %v472 = vpop.permute.xlu0 %471
  %475 = vset.pattern.permute.xlu0 0
  %476 = vperm.xlu0 %475, %v362
  %v477 = vpop.permute.xlu0 %476
  %480 = vset.pattern.permute.xlu0 0
  %481 = vperm.xlu0 %480, %v363
  %v482 = vpop.permute.xlu0 %481
  %485 = vset.pattern.permute.xlu0 0
  %486 = vperm.xlu0 %485, %v364
  %v487 = vpop.permute.xlu0 %486
  %490 = vset.pattern.permute.xlu0 0
  %491 = vperm.xlu0 %490, %v365
  %v492 = vpop.permute.xlu0 %491
  %v494 = vsub.f32 %v286, %v417
  %v495 = vsub.f32 %v287, %v422
  %v496 = vsub.f32 %v288, %v427
  %v497 = vsub.f32 %v289, %v432
  %v498 = vsub.f32 %v290, %v437
  %v499 = vsub.f32 %v291, %v442
  %v500 = vsub.f32 %v292, %v447
  %v501 = vsub.f32 %v293, %v452
  %v502 = vsub.f32 %v294, %v457
  %v503 = vsub.f32 %v295, %v462
  %v504 = vsub.f32 %v296, %v467
  %v505 = vsub.f32 %v297, %v472
  %v506 = vsub.f32 %v298, %v477
  %v507 = vsub.f32 %v299, %v482
  %v508 = vsub.f32 %v300, %v487
  %v509 = vsub.f32 %v301, %v492
  %v510 = vmul.f32 %v494, 1.442695
  %v511 = vpow.pop %v510
  %v512 = vmul.f32 %v495, 1.442695
  %v513 = vpow.pop %v512
  %v514 = vmul.f32 %v496, 1.442695
  %v515 = vpow.pop %v514
  %v516 = vmul.f32 %v497, 1.442695
  %v517 = vpow.pop %v516
  %v518 = vmul.f32 %v498, 1.442695
  %v519 = vpow.pop %v518
  %v520 = vmul.f32 %v499, 1.442695
  %v521 = vpow.pop %v520
  %v522 = vmul.f32 %v500, 1.442695
  %v523 = vpow.pop %v522
  %v524 = vmul.f32 %v501, 1.442695
  %v525 = vpow.pop %v524
  %v526 = vmul.f32 %v502, 1.442695
  %v527 = vpow.pop %v526
  %v528 = vmul.f32 %v503, 1.442695
  %v529 = vpow.pop %v528
  %v530 = vmul.f32 %v504, 1.442695
  %v531 = vpow.pop %v530
  %v532 = vmul.f32 %v505, 1.442695
  %v533 = vpow.pop %v532
  %v534 = vmul.f32 %v506, 1.442695
  %v535 = vpow.pop %v534
  %v536 = vmul.f32 %v507, 1.442695
  %v537 = vpow.pop %v536
  %v538 = vmul.f32 %v508, 1.442695
  %v539 = vpow.pop %v538
  %v540 = vmul.f32 %v509, 1.442695
  %v541 = vpow.pop %v540
  %v542 = vmul.f32 %v103, %v511
  %v543 = vmul.f32 %v104, %v513
  %v544 = vmul.f32 %v105, %v515
  %v545 = vmul.f32 %v106, %v517
  %v546 = vmul.f32 %v107, %v519
  %v547 = vmul.f32 %v108, %v521
  %v548 = vmul.f32 %v109, %v523
  %v549 = vmul.f32 %v110, %v525
  %v550 = vmul.f32 %v111, %v527
  %v551 = vmul.f32 %v112, %v529
  %v552 = vmul.f32 %v113, %v531
  %v553 = vmul.f32 %v114, %v533
  %v554 = vmul.f32 %v115, %v535
  %v555 = vmul.f32 %v116, %v537
  %v556 = vmul.f32 %v117, %v539
  %v557 = vmul.f32 %v118, %v541
  %v558 = vld [vmem:[#allocation3] sm:$0xff]
  %v559 = vld [vmem:[#allocation3 + $0x8] sm:$0xff]
  %v560 = vld [vmem:[#allocation3 + $0x10] sm:$0xff]
  %v561 = vld [vmem:[#allocation3 + $0x18] sm:$0xff]
  %v562 = vld [vmem:[#allocation3 + $0x20] sm:$0xff]
  %v563 = vld [vmem:[#allocation3 + $0x28] sm:$0xff]
  %v564 = vld [vmem:[#allocation3 + $0x30] sm:$0xff]
  %v565 = vld [vmem:[#allocation3 + $0x38] sm:$0xff]
  %v566 = vld [vmem:[#allocation3 + $0x40] sm:$0xff]
  %v567 = vld [vmem:[#allocation3 + $0x48] sm:$0xff]
  %v568 = vld [vmem:[#allocation3 + $0x50] sm:$0xff]
  %v569 = vld [vmem:[#allocation3 + $0x58] sm:$0xff]
  %v570 = vld [vmem:[#allocation3 + $0x60] sm:$0xff]
  %v571 = vld [vmem:[#allocation3 + $0x68] sm:$0xff]
  %v572 = vld [vmem:[#allocation3 + $0x70] sm:$0xff]
  %v573 = vld [vmem:[#allocation3 + $0x78] sm:$0xff]
  %v574 = vmul.f32 %v383, %v558
  %v575 = vmul.f32 %v385, %v559
  %v576 = vmul.f32 %v387, %v560
  %v577 = vmul.f32 %v389, %v561
  %v578 = vmul.f32 %v391, %v562
  %v579 = vmul.f32 %v393, %v563
  %v580 = vmul.f32 %v395, %v564
  %v581 = vmul.f32 %v397, %v565
  %v582 = vmul.f32 %v399, %v566
  %v583 = vmul.f32 %v401, %v567
  %v584 = vmul.f32 %v403, %v568
  %v585 = vmul.f32 %v405, %v569
  %v586 = vmul.f32 %v407, %v570
  %v587 = vmul.f32 %v409, %v571
  %v588 = vmul.f32 %v411, %v572
  %v589 = vmul.f32 %v413, %v573
  %590 = vadd.xlane.f32.xlu0 %v542
  %v591 = vpop.xlane.xlu0 %590
  %592 = vadd.xlane.f32.xlu0 %v543
  %v593 = vpop.xlane.xlu0 %592
  %594 = vadd.xlane.f32.xlu0 %v544
  %v595 = vpop.xlane.xlu0 %594
  %596 = vadd.xlane.f32.xlu0 %v545
  %v597 = vpop.xlane.xlu0 %596
  %598 = vadd.xlane.f32.xlu0 %v546
  %v599 = vpop.xlane.xlu0 %598
  %600 = vadd.xlane.f32.xlu0 %v547
  %v601 = vpop.xlane.xlu0 %600
  %602 = vadd.xlane.f32.xlu0 %v548
  %v603 = vpop.xlane.xlu0 %602
  %604 = vadd.xlane.f32.xlu0 %v549
  %v605 = vpop.xlane.xlu0 %604
  %606 = vadd.xlane.f32.xlu0 %v550
  %v607 = vpop.xlane.xlu0 %606
  %608 = vadd.xlane.f32.xlu0 %v551
  %v609 = vpop.xlane.xlu0 %608
  %610 = vadd.xlane.f32.xlu0 %v552
  %v611 = vpop.xlane.xlu0 %610
  %612 = vadd.xlane.f32.xlu0 %v553
  %v613 = vpop.xlane.xlu0 %612
  %614 = vadd.xlane.f32.xlu0 %v554
  %v615 = vpop.xlane.xlu0 %614
  %616 = vadd.xlane.f32.xlu0 %v555
  %v617 = vpop.xlane.xlu0 %616
  %618 = vadd.xlane.f32.xlu0 %v556
  %v619 = vpop.xlane.xlu0 %618
  %620 = vadd.xlane.f32.xlu0 %v557
  %v621 = vpop.xlane.xlu0 %620
  %v622 = vadd.f32 %v574, %v591
  %v623 = vadd.f32 %v575, %v593
  %v624 = vadd.f32 %v576, %v595
  %v625 = vadd.f32 %v577, %v597
  %v626 = vadd.f32 %v578, %v599
  %v627 = vadd.f32 %v579, %v601
  %v628 = vadd.f32 %v580, %v603
  %v629 = vadd.f32 %v581, %v605
  %v630 = vadd.f32 %v582, %v607
  %v631 = vadd.f32 %v583, %v609
  %v632 = vadd.f32 %v584, %v611
  %v633 = vadd.f32 %v585, %v613
  %v634 = vadd.f32 %v586, %v615
  %v635 = vadd.f32 %v587, %v617
  %v636 = vadd.f32 %v588, %v619
  %v637 = vadd.f32 %v589, %v621
  %vm638 = vcmask 7168
  %639 = vst.msk [vmem:[#allocation3] sm:$0xff] %vm638, %v622
  %640 = vst.msk [vmem:[#allocation3 + $0x8] sm:$0xff] %vm638, %v623
  %641 = vst.msk [vmem:[#allocation3 + $0x10] sm:$0xff] %vm638, %v624
  %642 = vst.msk [vmem:[#allocation3 + $0x18] sm:$0xff] %vm638, %v625
  %643 = vst.msk [vmem:[#allocation3 + $0x20] sm:$0xff] %vm638, %v626
  %644 = vst.msk [vmem:[#allocation3 + $0x28] sm:$0xff] %vm638, %v627
  %645 = vst.msk [vmem:[#allocation3 + $0x30] sm:$0xff] %vm638, %v628
  %646 = vst.msk [vmem:[#allocation3 + $0x38] sm:$0xff] %vm638, %v629
  %647 = vst.msk [vmem:[#allocation3 + $0x40] sm:$0xff] %vm638, %v630
  %648 = vst.msk [vmem:[#allocation3 + $0x48] sm:$0xff] %vm638, %v631
  %649 = vst.msk [vmem:[#allocation3 + $0x50] sm:$0xff] %vm638, %v632
  %650 = vst.msk [vmem:[#allocation3 + $0x58] sm:$0xff] %vm638, %v633
  %651 = vst.msk [vmem:[#allocation3 + $0x60] sm:$0xff] %vm638, %v634
  %652 = vst.msk [vmem:[#allocation3 + $0x68] sm:$0xff] %vm638, %v635
  %653 = vst.msk [vmem:[#allocation3 + $0x70] sm:$0xff] %vm638, %v636
  %654 = vst.msk [vmem:[#allocation3 + $0x78] sm:$0xff] %vm638, %v637
  %s655 = smul.u32 0, 128
  %s656 = sshra.s32 %s655, 3
  %s657 = sand.u32 %s655, 7
  %s658 = smul.addr %s656, 4
  %s659 = scalar_lea.vmem %s3, %s658
  %v660 = vld [vmem:[%s659] sm:$0xf]
  %v661 = vld [vmem:[%s659 + $0x4] sm:$0xf]
  %v662 = vld [vmem:[%s659 + $0x8] sm:$0xf]
  %v663 = vld [vmem:[%s659 + $0xc] sm:$0xf]
  %v664 = vld [vmem:[%s659 + $0x10] sm:$0xf]
  %v665 = vld [vmem:[%s659 + $0x14] sm:$0xf]
  %v666 = vld [vmem:[%s659 + $0x18] sm:$0xf]
  %v667 = vld [vmem:[%s659 + $0x1c] sm:$0xf]
  %v668 = vld [vmem:[%s659 + $0x20] sm:$0xf]
  %v669 = vld [vmem:[%s659 + $0x24] sm:$0xf]
  %v670 = vld [vmem:[%s659 + $0x28] sm:$0xf]
  %v671 = vld [vmem:[%s659 + $0x2c] sm:$0xf]
  %v672 = vld [vmem:[%s659 + $0x30] sm:$0xf]
  %v673 = vld [vmem:[%s659 + $0x34] sm:$0xf]
  %v674 = vld [vmem:[%s659 + $0x38] sm:$0xf]
  %v675 = vld [vmem:[%s659 + $0x3c] sm:$0xf]
  %v676 = vld [vmem:[#allocation4] sm:$0xff]
  %v677 = vld [vmem:[#allocation4 + $0x8] sm:$0xff]
  %v678 = vld [vmem:[#allocation4 + $0x10] sm:$0xff]
  %v679 = vld [vmem:[#allocation4 + $0x18] sm:$0xff]
  %v680 = vld [vmem:[#allocation4 + $0x20] sm:$0xff]
  %v681 = vld [vmem:[#allocation4 + $0x28] sm:$0xff]
  %v682 = vld [vmem:[#allocation4 + $0x30] sm:$0xff]
  %v683 = vld [vmem:[#allocation4 + $0x38] sm:$0xff]
  %v684 = vld [vmem:[#allocation4 + $0x40] sm:$0xff]
  %v685 = vld [vmem:[#allocation4 + $0x48] sm:$0xff]
  %v686 = vld [vmem:[#allocation4 + $0x50] sm:$0xff]
  %v687 = vld [vmem:[#allocation4 + $0x58] sm:$0xff]
  %v688 = vld [vmem:[#allocation4 + $0x60] sm:$0xff]
  %v689 = vld [vmem:[#allocation4 + $0x68] sm:$0xff]
  %v690 = vld [vmem:[#allocation4 + $0x70] sm:$0xff]
  %v691 = vld [vmem:[#allocation4 + $0x78] sm:$0xff]
  %693 = vset.pattern.permute.xlu0 0
  %694 = vperm.xlu0 %693, %v383
  %v695 = vpop.permute.xlu0 %694
  %698 = vset.pattern.permute.xlu0 0
  %699 = vperm.xlu0 %698, %v385
  %v700 = vpop.permute.xlu0 %699
  %703 = vset.pattern.permute.xlu0 0
  %704 = vperm.xlu0 %703, %v387
  %v705 = vpop.permute.xlu0 %704
  %708 = vset.pattern.permute.xlu0 0
  %709 = vperm.xlu0 %708, %v389
  %v710 = vpop.permute.xlu0 %709
  %713 = vset.pattern.permute.xlu0 0
  %714 = vperm.xlu0 %713, %v391
  %v715 = vpop.permute.xlu0 %714
  %718 = vset.pattern.permute.xlu0 0
  %719 = vperm.xlu0 %718, %v393
  %v720 = vpop.permute.xlu0 %719
  %723 = vset.pattern.permute.xlu0 0
  %724 = vperm.xlu0 %723, %v395
  %v725 = vpop.permute.xlu0 %724
  %728 = vset.pattern.permute.xlu0 0
  %729 = vperm.xlu0 %728, %v397
  %v730 = vpop.permute.xlu0 %729
  %733 = vset.pattern.permute.xlu0 0
  %734 = vperm.xlu0 %733, %v399
  %v735 = vpop.permute.xlu0 %734
  %738 = vset.pattern.permute.xlu0 0
  %739 = vperm.xlu0 %738, %v401
  %v740 = vpop.permute.xlu0 %739
  %743 = vset.pattern.permute.xlu0 0
  %744 = vperm.xlu0 %743, %v403
  %v745 = vpop.permute.xlu0 %744
  %748 = vset.pattern.permute.xlu0 0
  %749 = vperm.xlu0 %748, %v405
  %v750 = vpop.permute.xlu0 %749
  %753 = vset.pattern.permute.xlu0 0
  %754 = vperm.xlu0 %753, %v407
  %v755 = vpop.permute.xlu0 %754
  %758 = vset.pattern.permute.xlu0 0
  %759 = vperm.xlu0 %758, %v409
  %v760 = vpop.permute.xlu0 %759
  %763 = vset.pattern.permute.xlu0 0
  %764 = vperm.xlu0 %763, %v411
  %v765 = vpop.permute.xlu0 %764
  %768 = vset.pattern.permute.xlu0 0
  %769 = vperm.xlu0 %768, %v413
  %v770 = vpop.permute.xlu0 %769
  %v772 = vmul.f32 %v695, %v676
  %v773 = vmul.f32 %v700, %v677
  %v774 = vmul.f32 %v705, %v678
  %v775 = vmul.f32 %v710, %v679
  %v776 = vmul.f32 %v715, %v680
  %v777 = vmul.f32 %v720, %v681
  %v778 = vmul.f32 %v725, %v682
  %v779 = vmul.f32 %v730, %v683
  %v780 = vmul.f32 %v735, %v684
  %v781 = vmul.f32 %v740, %v685
  %v782 = vmul.f32 %v745, %v686
  %v783 = vmul.f32 %v750, %v687
  %v784 = vmul.f32 %v755, %v688
  %v785 = vmul.f32 %v760, %v689
  %v786 = vmul.f32 %v765, %v690
  %v787 = vmul.f32 %v770, %v691
  %v788 = vpack.c.bf16 %v543, %v542
  %v789 = vpack.c.bf16 %v545, %v544
  %v790 = vpack.c.bf16 %v547, %v546
  %v791 = vpack.c.bf16 %v549, %v548
  %v792 = vpack.c.bf16 %v551, %v550
  %v793 = vpack.c.bf16 %v553, %v552
  %v794 = vpack.c.bf16 %v555, %v554
  %v795 = vpack.c.bf16 %v557, %v556
  %v812 = vunpack.c.l.b16 %v660
  %v813 = vunpack.c.l.b16 %v661
  %v814 = vunpack.c.l.b16 %v662
  %v815 = vunpack.c.l.b16 %v663
  %v816 = vunpack.c.l.b16 %v664
  %v817 = vunpack.c.l.b16 %v665
  %v818 = vunpack.c.l.b16 %v666
  %v819 = vunpack.c.l.b16 %v667
  %v820 = vunpack.c.l.b16 %v668
  %v821 = vunpack.c.l.b16 %v669
  %v822 = vunpack.c.l.b16 %v670
  %v823 = vunpack.c.l.b16 %v671
  %v824 = vunpack.c.l.b16 %v672
  %v825 = vunpack.c.l.b16 %v673
  %v826 = vunpack.c.l.b16 %v674
  %v827 = vunpack.c.l.b16 %v675
  %v828 = vpack.c.b16 %v813, %v812
  %v829 = vpack.c.b16 %v815, %v814
  %v830 = vpack.c.b16 %v817, %v816
  %v831 = vpack.c.b16 %v819, %v818
  %v832 = vpack.c.b16 %v821, %v820
  %v833 = vpack.c.b16 %v823, %v822
  %v834 = vpack.c.b16 %v825, %v824
  %v835 = vpack.c.b16 %v827, %v826
  %844 = vmatprep.subr.bf16.mxu0 0
  %845 = vmatpush1.bf16.msra.mxu0 %v835
  %846 = vmatprep.subr.bf16.mxu0 0
  %847 = vmatpush1.bf16.msra.mxu0 %v834
  %848 = vmatprep.subr.bf16.mxu0 0
  %849 = vmatpush1.bf16.msra.mxu0 %v833
  %850 = vmatprep.subr.bf16.mxu0 0
  %851 = vmatpush1.bf16.msra.mxu0 %v832
  %852 = vmatprep.subr.bf16.mxu0 0
  %853 = vmatpush1.bf16.msra.mxu0 %v831
  %854 = vmatprep.subr.bf16.mxu0 0
  %855 = vmatpush1.bf16.msra.mxu0 %v830
  %856 = vmatprep.subr.bf16.mxu0 0
  %857 = vmatpush1.bf16.msra.mxu0 %v829
  %858 = vmatprep.subr.bf16.mxu0 0
  %859 = vmatpush1.bf16.msra.mxu0 %v828
  %860 = vmatprep.subr.bf16.mxu0 0
  %861 = vmatpush2.bf16.msra.mxu0 0
  %862 = vmatprep.subr.bf16.mxu0 0
  %863 = vmatpush2.bf16.msra.mxu0 0
  %864 = vmatprep.subr.bf16.mxu0 0
  %865 = vmatpush2.bf16.msra.mxu0 0
  %866 = vmatprep.subr.bf16.mxu0 0
  %867 = vmatpush2.bf16.msra.mxu0 0
  %868 = vmatprep.subr.bf16.mxu0 0
  %869 = vmatpush2.bf16.msra.mxu0 0
  %870 = vmatprep.subr.bf16.mxu0 0
  %871 = vmatpush2.bf16.msra.mxu0 0
  %872 = vmatprep.subr.bf16.mxu0 0
  %873 = vmatpush2.bf16.msra.mxu0 0
  %874 = vmatprep.subr.bf16.mxu0 0
  %875 = vmatpush2.bf16.msra.mxu0 0
  %876 = vmatprep.mubr.bf16.mxu0 0
  %877 = vmatmul.mubr.bf16.gmra.mxu0 %v788
  %v878 = vpop.f32.mrf.mxu0
  %v879 = vadd.f32 0.0, %v878
  %v880 = vpop.f32.mrf.mxu0
  %v881 = vpop.f32.mrf.mxu0
  %v882 = vadd.f32 0.0, %v881
  %v883 = vpop.f32.mrf.mxu0
  %884 = vmatprep.mubr.bf16.mxu0 0
  %885 = vmatmul.mubr.bf16.gmra.mxu0 %v789
  %v886 = vpop.f32.mrf.mxu0
  %v887 = vadd.f32 0.0, %v886
  %v888 = vpop.f32.mrf.mxu0
  %v889 = vpop.f32.mrf.mxu0
  %v890 = vadd.f32 0.0, %v889
  %v891 = vpop.f32.mrf.mxu0
  %892 = vmatprep.mubr.bf16.mxu0 0
  %893 = vmatmul.mubr.bf16.gmra.mxu0 %v790
  %v894 = vpop.f32.mrf.mxu0
  %v895 = vadd.f32 0.0, %v894
  %v896 = vpop.f32.mrf.mxu0
  %v897 = vpop.f32.mrf.mxu0
  %v898 = vadd.f32 0.0, %v897
  %v899 = vpop.f32.mrf.mxu0
  %900 = vmatprep.mubr.bf16.mxu0 0
  %901 = vmatmul.mubr.bf16.gmra.mxu0 %v791
  %v902 = vpop.f32.mrf.mxu0
  %v903 = vadd.f32 0.0, %v902
  %v904 = vpop.f32.mrf.mxu0
  %v905 = vpop.f32.mrf.mxu0
  %v906 = vadd.f32 0.0, %v905
  %v907 = vpop.f32.mrf.mxu0
  %908 = vmatprep.mubr.bf16.mxu0 0
  %909 = vmatmul.mubr.bf16.gmra.mxu0 %v792
  %v910 = vpop.f32.mrf.mxu0
  %v911 = vadd.f32 0.0, %v910
  %v912 = vpop.f32.mrf.mxu0
  %v913 = vpop.f32.mrf.mxu0
  %v914 = vadd.f32 0.0, %v913
  %v915 = vpop.f32.mrf.mxu0
  %916 = vmatprep.mubr.bf16.mxu0 0
  %917 = vmatmul.mubr.bf16.gmra.mxu0 %v793
  %v918 = vpop.f32.mrf.mxu0
  %v919 = vadd.f32 0.0, %v918
  %v920 = vpop.f32.mrf.mxu0
  %v921 = vpop.f32.mrf.mxu0
  %v922 = vadd.f32 0.0, %v921
  %v923 = vpop.f32.mrf.mxu0
  %924 = vmatprep.mubr.bf16.mxu0 0
  %925 = vmatmul.mubr.bf16.gmra.mxu0 %v794
  %v926 = vpop.f32.mrf.mxu0
  %v927 = vadd.f32 0.0, %v926
  %v928 = vpop.f32.mrf.mxu0
  %v929 = vpop.f32.mrf.mxu0
  %v930 = vadd.f32 0.0, %v929
  %v931 = vpop.f32.mrf.mxu0
  %932 = vmatprep.mubr.bf16.mxu0 0
  %933 = vmatmul.mubr.bf16.gmra.mxu0 %v795
  %v934 = vpop.f32.mrf.mxu0
  %v935 = vadd.f32 0.0, %v934
  %v936 = vpop.f32.mrf.mxu0
  %v937 = vpop.f32.mrf.mxu0
  %v938 = vadd.f32 0.0, %v937
  %v939 = vpop.f32.mrf.mxu0
  %940 = vdwg.mxu0
  %v941 = vadd.f32 %v772, %v879
  %v942 = vadd.f32 %v773, %v882
  %v943 = vadd.f32 %v774, %v887
  %v944 = vadd.f32 %v775, %v890
  %v945 = vadd.f32 %v776, %v895
  %v946 = vadd.f32 %v777, %v898
  %v947 = vadd.f32 %v778, %v903
  %v948 = vadd.f32 %v779, %v906
  %v949 = vadd.f32 %v780, %v911
  %v950 = vadd.f32 %v781, %v914
  %v951 = vadd.f32 %v782, %v919
  %v952 = vadd.f32 %v783, %v922
  %v953 = vadd.f32 %v784, %v927
  %v954 = vadd.f32 %v785, %v930
  %v955 = vadd.f32 %v786, %v935
  %v956 = vadd.f32 %v787, %v938
  %957 = vst [vmem:[#allocation4] sm:$0xff] %v941
  %958 = vst [vmem:[#allocation4 + $0x8] sm:$0xff] %v942
  %959 = vst [vmem:[#allocation4 + $0x10] sm:$0xff] %v943
  %960 = vst [vmem:[#allocation4 + $0x18] sm:$0xff] %v944
  %961 = vst [vmem:[#allocation4 + $0x20] sm:$0xff] %v945
  %962 = vst [vmem:[#allocation4 + $0x28] sm:$0xff] %v946
  %963 = vst [vmem:[#allocation4 + $0x30] sm:$0xff] %v947
  %964 = vst [vmem:[#allocation4 + $0x38] sm:$0xff] %v948
  %965 = vst [vmem:[#allocation4 + $0x40] sm:$0xff] %v949
  %966 = vst [vmem:[#allocation4 + $0x48] sm:$0xff] %v950
  %967 = vst [vmem:[#allocation4 + $0x50] sm:$0xff] %v951
  %968 = vst [vmem:[#allocation4 + $0x58] sm:$0xff] %v952
  %969 = vst [vmem:[#allocation4 + $0x60] sm:$0xff] %v953
  %970 = vst [vmem:[#allocation4 + $0x68] sm:$0xff] %v954
  %971 = vst [vmem:[#allocation4 + $0x70] sm:$0xff] %v955
  %972 = vst [vmem:[#allocation4 + $0x78] sm:$0xff] %v956
  %973 = vst.msk [vmem:[#allocation2] sm:$0xff] %vm638, %v350
  %974 = vst.msk [vmem:[#allocation2 + $0x8] sm:$0xff] %vm638, %v351
  %975 = vst.msk [vmem:[#allocation2 + $0x10] sm:$0xff] %vm638, %v352
  %976 = vst.msk [vmem:[#allocation2 + $0x18] sm:$0xff] %vm638, %v353
  %977 = vst.msk [vmem:[#allocation2 + $0x20] sm:$0xff] %vm638, %v354
  %978 = vst.msk [vmem:[#allocation2 + $0x28] sm:$0xff] %vm638, %v355
  %979 = vst.msk [vmem:[#allocation2 + $0x30] sm:$0xff] %vm638, %v356
  %980 = vst.msk [vmem:[#allocation2 + $0x38] sm:$0xff] %vm638, %v357
  %981 = vst.msk [vmem:[#allocation2 + $0x40] sm:$0xff] %vm638, %v358
  %982 = vst.msk [vmem:[#allocation2 + $0x48] sm:$0xff] %vm638, %v359
  %983 = vst.msk [vmem:[#allocation2 + $0x50] sm:$0xff] %vm638, %v360
  %984 = vst.msk [vmem:[#allocation2 + $0x58] sm:$0xff] %vm638, %v361
  %985 = vst.msk [vmem:[#allocation2 + $0x60] sm:$0xff] %vm638, %v362
  %986 = vst.msk [vmem:[#allocation2 + $0x68] sm:$0xff] %vm638, %v363
  %987 = vst.msk [vmem:[#allocation2 + $0x70] sm:$0xff] %vm638, %v364
  %988 = vst.msk [vmem:[#allocation2 + $0x78] sm:$0xff] %vm638, %v365
  // Predicated region
  $region22: #{gat_layer_pallas.3} parent=0 // pred_check
    %p989 = pneg %p18
  $region23: #{gat_layer_pallas.3} parent=0 // pred_check_branch
    %991 = sbr.rel (%p989) target = $region25
  $region24: #{gat_layer_pallas.3} parent=0 // pred_region
    %v992 = vld [vmem:[#allocation3] sm:$0xff]
    %v993 = vld [vmem:[#allocation3 + $0x8] sm:$0xff]
    %v994 = vld [vmem:[#allocation3 + $0x10] sm:$0xff]
    %v995 = vld [vmem:[#allocation3 + $0x18] sm:$0xff]
    %v996 = vld [vmem:[#allocation3 + $0x20] sm:$0xff]
    %v997 = vld [vmem:[#allocation3 + $0x28] sm:$0xff]
    %v998 = vld [vmem:[#allocation3 + $0x30] sm:$0xff]
    %v999 = vld [vmem:[#allocation3 + $0x38] sm:$0xff]
    %v1000 = vld [vmem:[#allocation3 + $0x40] sm:$0xff]
    %v1001 = vld [vmem:[#allocation3 + $0x48] sm:$0xff]
    %v1002 = vld [vmem:[#allocation3 + $0x50] sm:$0xff]
    %v1003 = vld [vmem:[#allocation3 + $0x58] sm:$0xff]
    %v1004 = vld [vmem:[#allocation3 + $0x60] sm:$0xff]
    %v1005 = vld [vmem:[#allocation3 + $0x68] sm:$0xff]
    %v1006 = vld [vmem:[#allocation3 + $0x70] sm:$0xff]
    %v1007 = vld [vmem:[#allocation3 + $0x78] sm:$0xff]
    %v1008 = vrcp.pop %v992
    %v1009 = vrcp.pop %v993
    %v1010 = vrcp.pop %v994
    %v1011 = vrcp.pop %v995
    %v1012 = vrcp.pop %v996
    %v1013 = vrcp.pop %v997
    %v1014 = vrcp.pop %v998
    %v1015 = vrcp.pop %v999
    %v1016 = vrcp.pop %v1000
    %v1017 = vrcp.pop %v1001
    %v1018 = vrcp.pop %v1002
    %v1019 = vrcp.pop %v1003
    %v1020 = vrcp.pop %v1004
    %v1021 = vrcp.pop %v1005
    %v1022 = vrcp.pop %v1006
    %v1023 = vrcp.pop %v1007
    %v1024 = vld [vmem:[#allocation4] sm:$0xff]
    %v1025 = vld [vmem:[#allocation4 + $0x8] sm:$0xff]
    %v1026 = vld [vmem:[#allocation4 + $0x10] sm:$0xff]
    %v1027 = vld [vmem:[#allocation4 + $0x18] sm:$0xff]
    %v1028 = vld [vmem:[#allocation4 + $0x20] sm:$0xff]
    %v1029 = vld [vmem:[#allocation4 + $0x28] sm:$0xff]
    %v1030 = vld [vmem:[#allocation4 + $0x30] sm:$0xff]
    %v1031 = vld [vmem:[#allocation4 + $0x38] sm:$0xff]
    %v1032 = vld [vmem:[#allocation4 + $0x40] sm:$0xff]
    %v1033 = vld [vmem:[#allocation4 + $0x48] sm:$0xff]
    %v1034 = vld [vmem:[#allocation4 + $0x50] sm:$0xff]
    %v1035 = vld [vmem:[#allocation4 + $0x58] sm:$0xff]
    %v1036 = vld [vmem:[#allocation4 + $0x60] sm:$0xff]
    %v1037 = vld [vmem:[#allocation4 + $0x68] sm:$0xff]
    %v1038 = vld [vmem:[#allocation4 + $0x70] sm:$0xff]
    %v1039 = vld [vmem:[#allocation4 + $0x78] sm:$0xff]
    %1041 = vset.pattern.permute.xlu0 0
    %1042 = vperm.xlu0 %1041, %v1008
    %v1043 = vpop.permute.xlu0 %1042
    %1046 = vset.pattern.permute.xlu0 0
    %1047 = vperm.xlu0 %1046, %v1009
    %v1048 = vpop.permute.xlu0 %1047
    %1051 = vset.pattern.permute.xlu0 0
    %1052 = vperm.xlu0 %1051, %v1010
    %v1053 = vpop.permute.xlu0 %1052
    %1056 = vset.pattern.permute.xlu0 0
    %1057 = vperm.xlu0 %1056, %v1011
    %v1058 = vpop.permute.xlu0 %1057
    %1061 = vset.pattern.permute.xlu0 0
    %1062 = vperm.xlu0 %1061, %v1012
    %v1063 = vpop.permute.xlu0 %1062
    %1066 = vset.pattern.permute.xlu0 0
    %1067 = vperm.xlu0 %1066, %v1013
    %v1068 = vpop.permute.xlu0 %1067
    %1071 = vset.pattern.permute.xlu0 0
    %1072 = vperm.xlu0 %1071, %v1014
    %v1073 = vpop.permute.xlu0 %1072
    %1076 = vset.pattern.permute.xlu0 0
    %1077 = vperm.xlu0 %1076, %v1015
    %v1078 = vpop.permute.xlu0 %1077
    %1081 = vset.pattern.permute.xlu0 0
    %1082 = vperm.xlu0 %1081, %v1016
    %v1083 = vpop.permute.xlu0 %1082
    %1086 = vset.pattern.permute.xlu0 0
    %1087 = vperm.xlu0 %1086, %v1017
    %v1088 = vpop.permute.xlu0 %1087
    %1091 = vset.pattern.permute.xlu0 0
    %1092 = vperm.xlu0 %1091, %v1018
    %v1093 = vpop.permute.xlu0 %1092
    %1096 = vset.pattern.permute.xlu0 0
    %1097 = vperm.xlu0 %1096, %v1019
    %v1098 = vpop.permute.xlu0 %1097
    %1101 = vset.pattern.permute.xlu0 0
    %1102 = vperm.xlu0 %1101, %v1020
    %v1103 = vpop.permute.xlu0 %1102
    %1106 = vset.pattern.permute.xlu0 0
    %1107 = vperm.xlu0 %1106, %v1021
    %v1108 = vpop.permute.xlu0 %1107
    %1111 = vset.pattern.permute.xlu0 0
    %1112 = vperm.xlu0 %1111, %v1022
    %v1113 = vpop.permute.xlu0 %1112
    %1116 = vset.pattern.permute.xlu0 0
    %1117 = vperm.xlu0 %1116, %v1023
    %v1118 = vpop.permute.xlu0 %1117
    %v1120 = vmul.f32 %v1024, %v1043
    %v1121 = vmul.f32 %v1025, %v1048
    %v1122 = vmul.f32 %v1026, %v1053
    %v1123 = vmul.f32 %v1027, %v1058
    %v1124 = vmul.f32 %v1028, %v1063
    %v1125 = vmul.f32 %v1029, %v1068
    %v1126 = vmul.f32 %v1030, %v1073
    %v1127 = vmul.f32 %v1031, %v1078
    %v1128 = vmul.f32 %v1032, %v1083
    %v1129 = vmul.f32 %v1033, %v1088
    %v1130 = vmul.f32 %v1034, %v1093
    %v1131 = vmul.f32 %v1035, %v1098
    %v1132 = vmul.f32 %v1036, %v1103
    %v1133 = vmul.f32 %v1037, %v1108
    %v1134 = vmul.f32 %v1038, %v1113
    %v1135 = vmul.f32 %v1039, %v1118
    %v1136 = vmax.f32 %v1120, 0.0
    %v1137 = vmax.f32 %v1121, 0.0
    %v1138 = vmax.f32 %v1122, 0.0
    %v1139 = vmax.f32 %v1123, 0.0
    %v1140 = vmax.f32 %v1124, 0.0
    %v1141 = vmax.f32 %v1125, 0.0
    %v1142 = vmax.f32 %v1126, 0.0
    %v1143 = vmax.f32 %v1127, 0.0
    %v1144 = vmax.f32 %v1128, 0.0
    %v1145 = vmax.f32 %v1129, 0.0
    %v1146 = vmax.f32 %v1130, 0.0
    %v1147 = vmax.f32 %v1131, 0.0
    %v1148 = vmax.f32 %v1132, 0.0
    %v1149 = vmax.f32 %v1133, 0.0
    %v1150 = vmax.f32 %v1134, 0.0
    %v1151 = vmax.f32 %v1135, 0.0
    %1152 = vst [vmem:[%s4] sm:$0xff] %v1136
    %1153 = vst [vmem:[%s4 + $0x8] sm:$0xff] %v1137
    %1154 = vst [vmem:[%s4 + $0x10] sm:$0xff] %v1138
    %1155 = vst [vmem:[%s4 + $0x18] sm:$0xff] %v1139
    %1156 = vst [vmem:[%s4 + $0x20] sm:$0xff] %v1140
    %1157 = vst [vmem:[%s4 + $0x28] sm:$0xff] %v1141
    %1158 = vst [vmem:[%s4 + $0x30] sm:$0xff] %v1142
    %1159 = vst [vmem:[%s4 + $0x38] sm:$0xff] %v1143
    %1160 = vst [vmem:[%s4 + $0x40] sm:$0xff] %v1144
    %1161 = vst [vmem:[%s4 + $0x48] sm:$0xff] %v1145
    %1162 = vst [vmem:[%s4 + $0x50] sm:$0xff] %v1146
    %1163 = vst [vmem:[%s4 + $0x58] sm:$0xff] %v1147
    %1164 = vst [vmem:[%s4 + $0x60] sm:$0xff] %v1148
    %1165 = vst [vmem:[%s4 + $0x68] sm:$0xff] %v1149
    %1166 = vst [vmem:[%s4 + $0x70] sm:$0xff] %v1150
    %1167 = vst [vmem:[%s4 + $0x78] sm:$0xff] %v1151
  $region25: #{gat_layer_pallas.3} parent=0 // pred_fallthru
    _
  // Predicated region
  $region26: #{gat_layer_pallas.3} parent=0 // pred_check
    _
  $region27: #{gat_layer_pallas.3} parent=0 // pred_check_branch
    %1169 = sbr.rel (0) target = $region29
  $region28: #{gat_layer_pallas.3} parent=0 // pred_region
    _
  $region29: #{gat_layer_pallas.3} parent=0 // pred_fallthru
    _
  // Predicated region
  $region30: #{gat_layer_pallas.3} parent=0 // pred_check
    _
  $region31: #{gat_layer_pallas.3} parent=0 // pred_check_branch
    %1171 = sbr.rel (0) target = $region33
  $region32: #{gat_layer_pallas.3} parent=0 // pred_region
    _
  $region33: #{gat_layer_pallas.3} parent=0 // pred_fallthru
    _

</llo_original>
